<compile_context>
chip_gen: v5e
topology: v5e:2x2
jax: 0.10.0
libtpu: 0.0.40
codegen_flags: <defaults>
</compile_context>

<pallas_src>
import functools

import jax
import jax.numpy as jnp
from jax.experimental import pallas as pl
from jax.experimental.pallas import tpu as pltpu


def _round_up(x, m):
    return ((x + m - 1) // m) * m


def _pairwise_ranking_kernel(vc_ref, sc_ref, vr_ref, sr_ref, out_ref,
                             *, n, margin, tm, tn):
    i = pl.program_id(0)          # row-tile index  ("parallel")
    j = pl.program_id(1)          # col-tile index  ("arbitrary" / reduction)

    # Zero the resident (8, tn) partial-sum block at the start of each row sweep.
    @pl.when(j == 0)
    def _():
        out_ref[...] = jnp.zeros_like(out_ref)

    vc = vc_ref[...]              # (tm, 1)  values[row]
    sc = sc_ref[...]              # (tm, 1)  score[row]
    vr = vr_ref[...]              # (1, tn)  values[col]
    sr = sr_ref[...]              # (1, tn)  score[col]

    m = jnp.float32(margin)
    # Algebraic hoist: fold margin into the tiny (tm, 1) slice so each arm of
    # the select is a single broadcast subtract (no explicit dv temp).
    a_col = vc + m                # margin + values[row]
    b_col = vc - m                # values[row] - margin
    pred = sr > sc                # diff_score > 0 (direct compare, no subtract)
    arm_pos = a_col - vr          # = margin - (values[col] - values[row])
    arm_neg = vr - b_col          # = margin + (values[col] - values[row])
    losses = jnp.maximum(jnp.where(pred, arm_pos, arm_neg), 0.0)

    # (8, tm) ones for the MXU row-reduction.  All 8 result rows are identical
    # column sums of the tile; the wrapper divides the grand total by 8.
    ones8 = jnp.ones((8, tm), jnp.float32)

    def _accum(x):
        # Row reduction on the otherwise-idle MXU instead of the saturated VALU:
        # (8, tm) @ (tm, tn) -> (8, tn), accumulated into the resident block.
        out_ref[...] += jnp.dot(ones8, x, preferred_element_type=jnp.float32)

    row0 = i * tm
    col0 = j * tn
    interior = jnp.logical_and(row0 + tm <= n, col0 + tn <= n)

    @pl.when(interior)
    def _():
        _accum(losses)

    @pl.when(jnp.logical_not(interior))
    def _():
        # Edge tiles only: mask out zero-padded rows/cols so the mean is over
        # n*n.  Iotas/compares are built on the small (tm,1)/(1,tn) shapes and
        # combined with a single broadcast AND + where.
        rid = row0 + jax.lax.broadcasted_iota(jnp.int32, (tm, 1), 0)
        cid = col0 + jax.lax.broadcasted_iota(jnp.int32, (1, tn), 1)
        valid = jnp.logical_and(rid < n, cid < n)       # (tm, tn) via broadcast
        _accum(jnp.where(valid, losses, 0.0))


def _xla_pairwise_ranking_loss(values, score, margin):
    # Small-N fast path: kernel launch + pipeline prologue would dominate.
    dv = values[None, :] - values[:, None]
    pred = score[None, :] > score[:, None]
    return jnp.mean(jnp.maximum(jnp.where(pred, margin - dv, margin + dv), 0.0))


def pairwise_ranking_loss(values, score, margin=1.0, *,
                          xla_threshold=1024, block_rows=512, block_cols=None):
    assert values.ndim == 1 and score.ndim == 1
    assert values.shape[0] == score.shape[0]
    n = values.shape[0]
    assert n > 0, "mean over zero pairs is undefined"

    v32 = values.astype(jnp.float32)
    s32 = score.astype(jnp.float32)

    if n <= xla_threshold:
        return _xla_pairwise_ranking_loss(v32, s32, jnp.float32(margin))

    # Tile selection: keep tm moderate so np_r // tm >= 2 (megacore row split on
    # v7x) and grow tn (lane / reduction axis) first; cap tm*tn so live fused
    # f32 temporaries stay well under the 48 MiB VMEM budget set below.
    tm = int(block_rows)
    tn = min(4096, _round_up(n, 128)) if block_cols is None else int(block_cols)
    assert tm % 8 == 0 and tn % 128 == 0

    np_r = _round_up(n, tm)
    np_c = _round_up(n, tn)
    gr = np_r // tm
    gc = np_c // tn

    # Layout plumbing in the wrapper: pre-shaped column / row copies so the
    # kernel never does a lane<->sublane transpose.  Rows and columns are padded
    # independently to their own tile multiple.
    v_col = jnp.pad(v32, (0, np_r - n)).reshape(np_r, 1)
    s_col = jnp.pad(s32, (0, np_r - n)).reshape(np_r, 1)
    v_row = jnp.pad(v32, (0, np_c - n)).reshape(1, np_c)
    s_row = jnp.pad(s32, (0, np_c - n)).reshape(1, np_c)

    kernel = functools.partial(
        _pairwise_ranking_kernel, n=n, margin=float(margin), tm=tm, tn=tn)

    partials = pl.pallas_call(
        kernel,
        out_shape=jax.ShapeDtypeStruct((gr * 8, tn), jnp.float32),
        grid=(gr, gc),
        in_specs=[
            pl.BlockSpec((tm, 1), lambda i, j: (i, 0)),    # v_col
            pl.BlockSpec((tm, 1), lambda i, j: (i, 0)),    # s_col
            pl.BlockSpec((1, tn), lambda i, j: (0, j)),    # v_row
            pl.BlockSpec((1, tn), lambda i, j: (0, j)),    # s_row
        ],
        out_specs=pl.BlockSpec((8, tn), lambda i, j: (i, 0)),
        compiler_params=pltpu.CompilerParams(
            dimension_semantics=("parallel", "arbitrary"),
            vmem_limit_bytes=48 * 1024 * 1024,
        ),
    )(v_col, s_col, v_row, s_row)

    # Tiny final reduction outside the kernel.  Each of the 8 sublanes of a
    # row-tile block holds identical accumulated column sums (MXU ones-dot),
    # hence the extra factor of 8 in the normalizer.
    return jnp.sum(partials) / jnp.float32(8 * n * n)


def _reference_loss(values, score, margin=1.0):
    dv = values[None, :] - values[:, None]
    ds = score[None, :] - score[:, None]
    mask = (ds > 0).astype(jnp.float32) * 2.0 - 1.0
    return jnp.mean(jnp.maximum(margin - mask * dv, 0.0))


if __name__ == "__main__":
    key = jax.random.PRNGKey(0)
    k1, k2, k3, k4, k5, k6 = jax.random.split(key, 6)

    # 1) Small case matching the module spec (seq = 8, 1-D inputs): hits the
    #    small-N XLA fast path.
    n = 8
    values = jax.random.normal(k1, (n,), dtype=jnp.float32)
    score = jax.random.normal(k2, (n,), dtype=jnp.float32)
    loss = pairwise_ranking_loss(values, score, margin=1.0)
    jax.block_until_ready(loss)
    ref = _reference_loss(values, score, margin=1.0)
    assert jnp.allclose(loss, ref, rtol=1e-4, atol=1e-5), (loss, ref)

    # 2) Force the Pallas kernel with small tiles: multi-tile 2-D grid with both
    #    interior tiles (no masking) and edge tiles (iota masking).
    n2 = 800
    values2 = jax.random.normal(k3, (n2,), dtype=jnp.float32)
    score2 = jax.random.normal(k4, (n2,), dtype=jnp.float32)
    loss2 = pairwise_ranking_loss(values2, score2, margin=1.0,
                                  xla_threshold=0,
                                  block_rows=256, block_cols=256)
    jax.block_until_ready(loss2)
    ref2 = _reference_loss(values2, score2, margin=1.0)
    assert jnp.allclose(loss2, ref2, rtol=1e-3, atol=1e-4), (loss2, ref2)

    # 3) Default kernel configuration (tm=512, lane-wide tn) on a non-aligned n:
    #    exercises multiple row tiles (parallel axis) and edge masking.
    n3 = 1600
    values3 = jax.random.normal(k5, (n3,), dtype=jnp.float32)
    score3 = jax.random.normal(k6, (n3,), dtype=jnp.float32)
    loss3 = pairwise_ranking_loss(values3, score3, margin=1.0)
    jax.block_until_ready(loss3)
    ref3 = _reference_loss(values3, score3, margin=1.0)
    assert jnp.allclose(loss3, ref3, rtol=1e-3, atol=1e-4), (loss3, ref3)

    print("KERNEL_OK")
</pallas_src>

<mosaic_0001>
module attributes {stable_mosaic.version = 11 : i64} {
  func.func @_pairwise_ranking_kernel(%arg0: i32, %arg1: i32, %arg2: memref<256x1xf32, #tpu.memory_space<vmem>>, %arg3: memref<256x1xf32, #tpu.memory_space<vmem>>, %arg4: memref<1x256xf32, #tpu.memory_space<vmem>>, %arg5: memref<1x256xf32, #tpu.memory_space<vmem>>, %arg6: memref<8x256xf32, #tpu.memory_space<vmem>>) attributes {dimension_semantics = [#tpu.dimension_semantics<parallel>, #tpu.dimension_semantics<arbitrary>], iteration_bounds = array<i64: 4, 4>, scalar_prefetch = 0 : i64, scratch_operands = 0 : i64, tpu.core_type = #tpu.core_type<tc>, window_params = [{transform_indices = @transform_0, window_bounds = array<i64: 256, 1>}, {transform_indices = @transform_1, window_bounds = array<i64: 256, 1>}, {transform_indices = @transform_2, window_bounds = array<i64: 1, 256>}, {transform_indices = @transform_3, window_bounds = array<i64: 1, 256>}, {transform_indices = @transform_4, window_bounds = array<i64: 8, 256>}]} {
    %c0_i32 = arith.constant 0 : i32
    %0 = arith.cmpi eq, %arg1, %c0_i32 : i32
    %1 = arith.extui %0 : i1 to i32
    %c0_i32_0 = arith.constant 0 : i32
    %2 = arith.cmpi ne, %1, %c0_i32_0 : i32
    scf.if %2 {
      %cst_17 = arith.constant 0.000000e+00 : f32
      %36 = vector.broadcast %cst_17 : f32 to vector<8x256xf32>
      %c0_18 = arith.constant 0 : index
      %c0_19 = arith.constant 0 : index
      %37 = vector.load %arg6[%c0_18, %c0_19] : memref<8x256xf32, #tpu.memory_space<vmem>>, vector<8x256xf32>
      tpu.vector_store %arg6[%c0_18, %c0_19], %36 {strides = array<i32>} : memref<8x256xf32, #tpu.memory_space<vmem>>, vector<8x256xf32>,
    } else {
    }
    %c0 = arith.constant 0 : index
    %c0_1 = arith.constant 0 : index
    %3 = vector.load %arg2[%c0, %c0_1] : memref<256x1xf32, #tpu.memory_space<vmem>>, vector<256x1xf32>
    %c0_2 = arith.constant 0 : index
    %c0_3 = arith.constant 0 : index
    %4 = vector.load %arg3[%c0_2, %c0_3] : memref<256x1xf32, #tpu.memory_space<vmem>>, vector<256x1xf32>
    %c0_4 = arith.constant 0 : index
    %c0_5 = arith.constant 0 : index
    %5 = vector.load %arg4[%c0_4, %c0_5] : memref<1x256xf32, #tpu.memory_space<vmem>>, vector<1x256xf32>
    %c0_6 = arith.constant 0 : index
    %c0_7 = arith.constant 0 : index
    %6 = vector.load %arg5[%c0_6, %c0_7] : memref<1x256xf32, #tpu.memory_space<vmem>>, vector<1x256xf32>
    %cst = arith.constant 1.000000e+00 : f32
    %7 = vector.broadcast %cst : f32 to vector<256x1xf32>
    %8 = arith.addf %3, %7 : vector<256x1xf32>
    %cst_8 = arith.constant 1.000000e+00 : f32
    %9 = vector.broadcast %cst_8 : f32 to vector<256x1xf32>
    %10 = arith.subf %3, %9 : vector<256x1xf32>
    %11 = vector.broadcast %6 : vector<1x256xf32> to vector<256x256xf32>
    %12 = vector.broadcast %4 : vector<256x1xf32> to vector<256x256xf32>
    %13 = arith.cmpf ogt, %11, %12 : vector<256x256xf32>
    %14 = vector.broadcast %8 : vector<256x1xf32> to vector<256x256xf32>
    %15 = vector.broadcast %5 : vector<1x256xf32> to vector<256x256xf32>
    %16 = arith.subf %14, %15 : vector<256x256xf32>
    %17 = vector.broadcast %5 : vector<1x256xf32> to vector<256x256xf32>
    %18 = vector.broadcast %10 : vector<256x1xf32> to vector<256x256xf32>
    %19 = arith.subf %17, %18 : vector<256x256xf32>
    %20 = arith.select %13, %16, %19 : vector<256x256xi1>, vector<256x256xf32>
    %cst_9 = arith.constant 0.000000e+00 : f32
    %21 = vector.broadcast %cst_9 : f32 to vector<256x256xf32>
    %22 = arith.maximumf %20, %21 : vector<256x256xf32>
    %cst_10 = arith.constant 1.000000e+00 : f32
    %23 = vector.broadcast %cst_10 : f32 to vector<8x256xf32>
    %c256_i32 = arith.constant 256 : i32
    %24 = arith.muli %arg0, %c256_i32 : i32
    %c256_i32_11 = arith.constant 256 : i32
    %25 = arith.muli %arg1, %c256_i32_11 : i32
    %c256_i32_12 = arith.constant 256 : i32
    %26 = arith.addi %24, %c256_i32_12 : i32
    %c800_i32 = arith.constant 800 : i32
    %27 = arith.cmpi sle, %26, %c800_i32 : i32
    %c256_i32_13 = arith.constant 256 : i32
    %28 = arith.addi %25, %c256_i32_13 : i32
    %c800_i32_14 = arith.constant 800 : i32
    %29 = arith.cmpi sle, %28, %c800_i32_14 : i32
    %30 = arith.andi %27, %29 : i1
    %31 = arith.extui %30 : i1 to i32
    %c0_i32_15 = arith.constant 0 : i32
    %32 = arith.cmpi ne, %31, %c0_i32_15 : i32
    scf.if %32 {
      %c0_17 = arith.constant 0 : index
      %c0_18 = arith.constant 0 : index
      %36 = vector.load %arg6[%c0_17, %c0_18] : memref<8x256xf32, #tpu.memory_space<vmem>>, vector<8x256xf32>
      %cst_19 = arith.constant dense<0.000000e+00> : vector<8x256xf32>
      %37 = tpu.matmul %23, %22, %cst_19 {dimension_numbers = #tpu.dot_dimension_numbers<[1], [0], [0], [1], [0, 0, 1, 1], [], []>} : vector<8x256xf32>, vector<256x256xf32>, vector<8x256xf32> -> vector<8x256xf32>
      %38 = arith.addf %36, %37 : vector<8x256xf32>
      %c0_20 = arith.constant 0 : index
      %c0_21 = arith.constant 0 : index
      %39 = vector.load %arg6[%c0_20, %c0_21] : memref<8x256xf32, #tpu.memory_space<vmem>>, vector<8x256xf32>
      tpu.vector_store %arg6[%c0_20, %c0_21], %38 {strides = array<i32>} : memref<8x256xf32, #tpu.memory_space<vmem>>, vector<8x256xf32>,
    } else {
    }
    %true = arith.constant true
    %33 = arith.xori %30, %true : i1
    %34 = arith.extui %33 : i1 to i32
    %c0_i32_16 = arith.constant 0 : i32
    %35 = arith.cmpi ne, %34, %c0_i32_16 : i32
    scf.if %35 {
      %36 = tpu.iota {dimensions = array<i32: 0>} : vector<256x1xi32>
      %37 = vector.broadcast %24 : i32 to vector<256x1xi32>
      %38 = arith.addi %37, %36 : vector<256x1xi32>
      %39 = tpu.iota {dimensions = array<i32: 1>} : vector<1x256xi32>
      %40 = vector.broadcast %25 : i32 to vector<1x256xi32>
      %41 = arith.addi %40, %39 : vector<1x256xi32>
      %c800_i32_17 = arith.constant 800 : i32
      %42 = vector.broadcast %c800_i32_17 : i32 to vector<256x1xi32>
      %43 = arith.cmpi slt, %38, %42 : vector<256x1xi32>
      %c800_i32_18 = arith.constant 800 : i32
      %44 = vector.broadcast %c800_i32_18 : i32 to vector<1x256xi32>
      %45 = arith.cmpi slt, %41, %44 : vector<1x256xi32>
      %46 = vector.broadcast %43 : vector<256x1xi1> to vector<256x256xi1>
      %47 = vector.broadcast %45 : vector<1x256xi1> to vector<256x256xi1>
      %48 = arith.andi %46, %47 : vector<256x256xi1>
      %cst_19 = arith.constant 0.000000e+00 : f32
      %49 = vector.broadcast %cst_19 : f32 to vector<256x256xf32>
      %50 = arith.select %48, %22, %49 : vector<256x256xi1>, vector<256x256xf32>
      %c0_20 = arith.constant 0 : index
      %c0_21 = arith.constant 0 : index
      %51 = vector.load %arg6[%c0_20, %c0_21] : memref<8x256xf32, #tpu.memory_space<vmem>>, vector<8x256xf32>
      %cst_22 = arith.constant dense<0.000000e+00> : vector<8x256xf32>
      %52 = tpu.matmul %23, %50, %cst_22 {dimension_numbers = #tpu.dot_dimension_numbers<[1], [0], [0], [1], [0, 0, 1, 1], [], []>} : vector<8x256xf32>, vector<256x256xf32>, vector<8x256xf32> -> vector<8x256xf32>
      %53 = arith.addf %51, %52 : vector<8x256xf32>
      %c0_23 = arith.constant 0 : index
      %c0_24 = arith.constant 0 : index
      %54 = vector.load %arg6[%c0_23, %c0_24] : memref<8x256xf32, #tpu.memory_space<vmem>>, vector<8x256xf32>
      tpu.vector_store %arg6[%c0_23, %c0_24], %53 {strides = array<i32>} : memref<8x256xf32, #tpu.memory_space<vmem>>, vector<8x256xf32>,
    } else {
    }
    return
  }
  func.func @transform_0(%arg0: i32, %arg1: i32) -> (i32, i32) {
    %c0_i32 = arith.constant 0 : i32
    %c0_i32_0 = arith.constant 0 : i32
    return %arg0, %c0_i32 : i32, i32
  }
  func.func @transform_1(%arg0: i32, %arg1: i32) -> (i32, i32) {
    %c0_i32 = arith.constant 0 : i32
    %c0_i32_0 = arith.constant 0 : i32
    return %arg0, %c0_i32 : i32, i32
  }
  func.func @transform_2(%arg0: i32, %arg1: i32) -> (i32, i32) {
    %c0_i32 = arith.constant 0 : i32
    %c0_i32_0 = arith.constant 0 : i32
    return %c0_i32, %arg1 : i32, i32
  }
  func.func @transform_3(%arg0: i32, %arg1: i32) -> (i32, i32) {
    %c0_i32 = arith.constant 0 : i32
    %c0_i32_0 = arith.constant 0 : i32
    return %c0_i32, %arg1 : i32, i32
  }
  func.func @transform_4(%arg0: i32, %arg1: i32) -> (i32, i32) {
    %c0_i32 = arith.constant 0 : i32
    %c0_i32_0 = arith.constant 0 : i32
    return %arg0, %c0_i32 : i32, i32
  }
}

</mosaic_0001>

<llo_original>
// kernel: tpu_custom_call.1
$region0: #{tpu_custom_call.1}
  #allocation0 [shape = 'u32[]', space=smem, size = 0x4, offset = 0x4, fixed_abs, tag = 'smem constant byte address 0x4 - core index']
  #allocation1 [shape = 'u32[72,128]{1,0:T(1,128)}', space=vmem, size = 0x9000, scoped, tag = 'internal scratch']
  %s0 = inlined_call_operand.vmem [shape: f32[1024,1], index: 0, kind: input, shape index: {}]
  %s1 = inlined_call_operand.vmem [shape: f32[1024,1], index: 1, kind: input, shape index: {}]
  %s2 = inlined_call_operand.vmem [shape: f32[1,1024], index: 2, kind: input, shape index: {}]
  %s3 = inlined_call_operand.vmem [shape: f32[1,1024], index: 3, kind: input, shape index: {}]
  %s4 = inlined_call_operand.hbm [shape: f32[32,256], index: 4, kind: output, shape index: {}]
  %s5 = sld [smem:[#allocation0]]
  $region61: #{tpu_custom_call.1} parent=0
    _
  %s7 = ssub.s32 1, %s5
  %s8 = scalar_select 0, %s7, %s5
  $region1: #{tpu_custom_call.1} parent=0
    #allocation2 [shape = 'u8[16384]{0}', space=vmem, size = 0x4000, scoped, tag = 'output window, operand 0']
    #allocation3 [shape = 's32[2]{0}', space=sflag, size = 0x8, scoped, tag = 'scoped memory for tpu_custom_call.1']
    %9 = vsyncpa [#allocation3], 0
    %s10 = scalar_lea.sflag [#allocation3], 1
    %11 = vsyncpa %s10, 0
    loop: start=0, step=1, limit=18
    $region2: #{tpu_custom_call.1} parent=1 // loop_pre_header
      _
    $region3: #{tpu_custom_call.1} parent=1 // loop_header
      %s13 = sphi 0, %s17
      %p14 = scmp.ge.s32.totalorder %s13, 18
      %s20 = sphi 0, %s32
      %s21 = sphi 0, %s28
      %s22 = sphi 0, %s20
      %s23 = sphi 0, %s21
      %s24 = sphi 0, %s22
      %s25 = sphi 0, %s23
      %s35 = sphi 0, %s37
      %s38 = sphi 0, %s35
      %s39 = sphi 0, %s38
      %s55 = sphi 0, %s39
      %s61 = sphi 0, %s63
      %s64 = sphi 0, %s61
      %s65 = sphi 0, %s64
      %s81 = sphi 0, %s65
      %s87 = sphi 0, %s89
      %s90 = sphi 0, %s87
      %s91 = sphi 0, %s90
      %s107 = sphi 0, %s91
      %s113 = sphi 0, %s115
      %s116 = sphi 0, %s113
      %s117 = sphi 0, %s116
      %s133 = sphi 0, %s117
      %s139 = sphi 0, %s141
      %s142 = sphi 0, %s139
      %s143 = sphi 0, %s142
      %s159 = sphi 0, %s143
    $region4: #{tpu_custom_call.1} parent=1 // loop_header_branch
      %16 = sbr.rel (%p14) target = $region8
    $region5: #{tpu_custom_call.1} parent=1 // loop_body
      %s18 = ssub.s32 %s13, 1
      %s19 = ssub.s32 %s13, 2
      %s26 = sadd.s32 1, %s21
      %p27 = scmp.ge.s32.totalorder %s26, 4
      %s28 = scalar_select %p27, 0, %s26
      %s29 = sadd.s32 1, %s20
      %s30 = scalar_select %p27, %s29, %s20
      %p31 = scmp.ge.s32.totalorder %s30, 4
      %s32 = scalar_select %p31, 0, %s30
      %s33 = ssub.s32 %s20, %s32
      %p34 = scmp.eq.s32.totalorder %s33, 0
      %s36 = sadd.s32 %s35, 1
      %s37 = scalar_select %p34, %s35, %s36
      %p40 = pneg %p34
      %p41 = scmp.eq.s32.totalorder %s13, 15
      %p42 = por %p40, %p41
      %p43 = scmp.ne.s32.totalorder %s35, %s38
      %p44 = scmp.eq.s32.totalorder %s13, 0
      %p45 = por %p43, %p44
      %p46 = scmp.ne.s32.totalorder %s35, %s38
      %p47 = scmp.eq.s32.totalorder %s18, 15
      %p48 = por %p46, %p47
      %p49 = scmp.ne.s32.totalorder %s38, %s39
      %p50 = scmp.eq.s32.totalorder %s18, 0
      %p51 = por %p49, %p50
      %p52 = scmp.ne.s32.totalorder %s38, %s39
      %p53 = scmp.eq.s32.totalorder %s19, 15
      %p54 = por %p52, %p53
      %p56 = scmp.ne.s32.totalorder %s39, %s55
      %p57 = scmp.eq.s32.totalorder %s19, 0
      %p58 = por %p56, %p57
      %s59 = ssub.s32 %s20, %s32
      %p60 = scmp.eq.s32.totalorder %s59, 0
      %s62 = sadd.s32 %s61, 1
      %s63 = scalar_select %p60, %s61, %s62
      %p66 = pneg %p60
      %p67 = scmp.eq.s32.totalorder %s13, 15
      %p68 = por %p66, %p67
      %p69 = scmp.ne.s32.totalorder %s61, %s64
      %p70 = scmp.eq.s32.totalorder %s13, 0
      %p71 = por %p69, %p70
      %p72 = scmp.ne.s32.totalorder %s61, %s64
      %p73 = scmp.eq.s32.totalorder %s18, 15
      %p74 = por %p72, %p73
      %p75 = scmp.ne.s32.totalorder %s64, %s65
      %p76 = scmp.eq.s32.totalorder %s18, 0
      %p77 = por %p75, %p76
      %p78 = scmp.ne.s32.totalorder %s64, %s65
      %p79 = scmp.eq.s32.totalorder %s19, 15
      %p80 = por %p78, %p79
      %p82 = scmp.ne.s32.totalorder %s65, %s81
      %p83 = scmp.eq.s32.totalorder %s19, 0
      %p84 = por %p82, %p83
      %s85 = ssub.s32 %s21, %s28
      %p86 = scmp.eq.s32.totalorder %s85, 0
      %s88 = sadd.s32 %s87, 1
      %s89 = scalar_select %p86, %s87, %s88
      %p92 = pneg %p86
      %p93 = scmp.eq.s32.totalorder %s13, 15
      %p94 = por %p92, %p93
      %p95 = scmp.ne.s32.totalorder %s87, %s90
      %p96 = scmp.eq.s32.totalorder %s13, 0
      %p97 = por %p95, %p96
      %p98 = scmp.ne.s32.totalorder %s87, %s90
      %p99 = scmp.eq.s32.totalorder %s18, 15
      %p100 = por %p98, %p99
      %p101 = scmp.ne.s32.totalorder %s90, %s91
      %p102 = scmp.eq.s32.totalorder %s18, 0
      %p103 = por %p101, %p102
      %p104 = scmp.ne.s32.totalorder %s90, %s91
      %p105 = scmp.eq.s32.totalorder %s19, 15
      %p106 = por %p104, %p105
      %p108 = scmp.ne.s32.totalorder %s91, %s107
      %p109 = scmp.eq.s32.totalorder %s19, 0
      %p110 = por %p108, %p109
      %s111 = ssub.s32 %s21, %s28
      %p112 = scmp.eq.s32.totalorder %s111, 0
      %s114 = sadd.s32 %s113, 1
      %s115 = scalar_select %p112, %s113, %s114
      %p118 = pneg %p112
      %p119 = scmp.eq.s32.totalorder %s13, 15
      %p120 = por %p118, %p119
      %p121 = scmp.ne.s32.totalorder %s113, %s116
      %p122 = scmp.eq.s32.totalorder %s13, 0
      %p123 = por %p121, %p122
      %p124 = scmp.ne.s32.totalorder %s113, %s116
      %p125 = scmp.eq.s32.totalorder %s18, 15
      %p126 = por %p124, %p125
      %p127 = scmp.ne.s32.totalorder %s116, %s117
      %p128 = scmp.eq.s32.totalorder %s18, 0
      %p129 = por %p127, %p128
      %p130 = scmp.ne.s32.totalorder %s116, %s117
      %p131 = scmp.eq.s32.totalorder %s19, 15
      %p132 = por %p130, %p131
      %p134 = scmp.ne.s32.totalorder %s117, %s133
      %p135 = scmp.eq.s32.totalorder %s19, 0
      %p136 = por %p134, %p135
      %s137 = ssub.s32 %s20, %s32
      %p138 = scmp.eq.s32.totalorder %s137, 0
      %s140 = sadd.s32 %s139, 1
      %s141 = scalar_select %p138, %s139, %s140
      %p144 = pneg %p138
      %p145 = scmp.eq.s32.totalorder %s13, 15
      %p146 = por %p144, %p145
      %p147 = scmp.ne.s32.totalorder %s139, %s142
      %p148 = scmp.eq.s32.totalorder %s13, 0
      %p149 = por %p147, %p148
      %p150 = scmp.ne.s32.totalorder %s139, %s142
      %p151 = scmp.eq.s32.totalorder %s18, 15
      %p152 = por %p150, %p151
      %p153 = scmp.ne.s32.totalorder %s142, %s143
      %p154 = scmp.eq.s32.totalorder %s18, 0
      %p155 = por %p153, %p154
      %p156 = scmp.ne.s32.totalorder %s142, %s143
      %p157 = scmp.eq.s32.totalorder %s19, 15
      %p158 = por %p156, %p157
      %p160 = scmp.ne.s32.totalorder %s143, %s159
      %p161 = scmp.eq.s32.totalorder %s19, 0
      %p162 = por %p160, %p161
      %p163 = scmp.le.s32.totalorder 1, %s13
      %p164 = scmp.lt.s32.totalorder %s13, 17
      %p165 = pnand %p163, %p164
      %p166 = pneg %p165
      // Predicated region
      $region9: #{tpu_custom_call.1} parent=5 // pred_check
        _
      $region10: #{tpu_custom_call.1} parent=5 // pred_check_branch
        %168 = sbr.rel (%p165) target = $region12
      $region11: #{tpu_custom_call.1} parent=5 // pred_region
        %s169 = ssub.s32 %s13, 1
      $region12: #{tpu_custom_call.1} parent=5 // pred_fallthru
        _
      %p170 = scmp.lt.s32.totalorder %s13, 16
      // Predicated region
      $region13: #{tpu_custom_call.1} parent=5 // pred_check
        %p171 = pneg %p170
      $region14: #{tpu_custom_call.1} parent=5 // pred_check_branch
        %173 = sbr.rel (%p171) target = $region16
      $region15: #{tpu_custom_call.1} parent=5 // pred_region
        // Predicated region
        $region17: #{tpu_custom_call.1} parent=15 // pred_check
          %p174 = pneg %p45
        $region18: #{tpu_custom_call.1} parent=15 // pred_check_branch
          %176 = sbr.rel (%p174) target = $region20
        $region19: #{tpu_custom_call.1} parent=15 // pred_region
          %s177 = smul.u32 32, %s20
          %p178 = scmp.lt.s32.totalorder %s177, 127
          %s179 = scalar_select %p178, %s177, 127
          %s180 = smul.addr %s179, 8
          %s181 = scalar_lea.vmem %s0, %s180
          %s182 = smul.u32 32, %s20
        $region20: #{tpu_custom_call.1} parent=15 // pred_fallthru
          _
        // Predicated region
        $region21: #{tpu_custom_call.1} parent=15 // pred_check
          %p183 = pneg %p71
        $region22: #{tpu_custom_call.1} parent=15 // pred_check_branch
          %185 = sbr.rel (%p183) target = $region24
        $region23: #{tpu_custom_call.1} parent=15 // pred_region
          %s186 = smul.u32 32, %s20
          %p187 = scmp.lt.s32.totalorder %s186, 127
          %s188 = scalar_select %p187, %s186, 127
          %s189 = smul.addr %s188, 8
          %s190 = scalar_lea.vmem %s1, %s189
          %s191 = smul.u32 32, %s20
        $region24: #{tpu_custom_call.1} parent=15 // pred_fallthru
          _
        // Predicated region
        $region25: #{tpu_custom_call.1} parent=15 // pred_check
          %p192 = pneg %p97
        $region26: #{tpu_custom_call.1} parent=15 // pred_check_branch
          %194 = sbr.rel (%p192) target = $region28
        $region27: #{tpu_custom_call.1} parent=15 // pred_region
          %s195 = smul.u32 2, %s21
          %p196 = scmp.lt.s32.totalorder %s195, 7
          %s197 = scalar_select %p196, %s195, 7
          %s198 = scalar_lea.vmem %s2, %s197
          %s199 = smul.u32 2, %s21
        $region28: #{tpu_custom_call.1} parent=15 // pred_fallthru
          _
        // Predicated region
        $region29: #{tpu_custom_call.1} parent=15 // pred_check
          %p200 = pneg %p123
        $region30: #{tpu_custom_call.1} parent=15 // pred_check_branch
          %202 = sbr.rel (%p200) target = $region32
        $region31: #{tpu_custom_call.1} parent=15 // pred_region
          %s203 = smul.u32 2, %s21
          %p204 = scmp.lt.s32.totalorder %s203, 7
          %s205 = scalar_select %p204, %s203, 7
          %s206 = scalar_lea.vmem %s3, %s205
          %s207 = smul.u32 2, %s21
        $region32: #{tpu_custom_call.1} parent=15 // pred_fallthru
          _
      $region16: #{tpu_custom_call.1} parent=5 // pred_fallthru
        _
      %p208 = scmp.le.s32.totalorder 1, %s13
      %p209 = scmp.lt.s32.totalorder %s13, 17
      %p210 = pnand %p208, %p209
      %p211 = pneg %p210
      // Predicated region
      $region33: #{tpu_custom_call.1} parent=5 // pred_check
        _
      $region34: #{tpu_custom_call.1} parent=5 // pred_check_branch
        %213 = sbr.rel (%p210) target = $region36
      $region35: #{tpu_custom_call.1} parent=5 // pred_region
        %s214 = ssub.s32 %s13, 1
        %s215 = smul.u32 32, %s22
        %p216 = scmp.lt.s32.totalorder %s215, 127
        %s217 = scalar_select %p216, %s215, 127
        %s218 = smul.addr %s217, 8
        %s219 = scalar_lea.vmem %s0, %s218
        %p220 = pneg %p51
        %p221 = pneg %p48
        %s222 = smul.u32 32, %s22
        %p223 = scmp.lt.s32.totalorder %s222, 127
        %s224 = scalar_select %p223, %s222, 127
        %s225 = smul.addr %s224, 8
        %s226 = scalar_lea.vmem %s1, %s225
        %p227 = pneg %p77
        %p228 = pneg %p74
        %s229 = smul.u32 2, %s23
        %p230 = scmp.lt.s32.totalorder %s229, 7
        %s231 = scalar_select %p230, %s229, 7
        %s232 = scalar_lea.vmem %s2, %s231
        %p233 = pneg %p103
        %p234 = pneg %p100
        %s235 = smul.u32 2, %s23
        %p236 = scmp.lt.s32.totalorder %s235, 7
        %s237 = scalar_select %p236, %s235, 7
        %s238 = scalar_lea.vmem %s3, %s237
        %p239 = pneg %p129
        %p240 = pneg %p126
        %p241 = pneg %p155
        %p242 = pneg %p152
        %s243 = sand.u32 %s142, 1
        %s244 = scalar_lea.sflag [#allocation3], %s243
        %s245 = sand.u32 %s142, 1
        %s246 = smul.addr %s245, 16
        %s247 = scalar_lea.vmem [#allocation2], %s246
        %s248 = smul.u32 32, %s22
        %p249 = scmp.lt.s32.totalorder %s248, 127
        %s250 = scalar_select %p249, %s248, 127
        %s251 = smul.addr %s250, 8
        %s252 = scalar_lea.vmem %s0, %s251
        %s253 = smul.u32 32, %s22
        %s254 = smul.u32 32, %s22
        %p255 = scmp.lt.s32.totalorder %s254, 127
        %s256 = scalar_select %p255, %s254, 127
        %s257 = smul.addr %s256, 8
        %s258 = scalar_lea.vmem %s1, %s257
        %s259 = smul.u32 32, %s22
        %s260 = smul.u32 2, %s23
        %p261 = scmp.lt.s32.totalorder %s260, 7
        %s262 = scalar_select %p261, %s260, 7
        %s263 = scalar_lea.vmem %s2, %s262
        %s264 = smul.u32 2, %s23
        %s265 = smul.u32 2, %s23
        %p266 = scmp.lt.s32.totalorder %s265, 7
        %s267 = scalar_select %p266, %s265, 7
        %s268 = scalar_lea.vmem %s3, %s267
        %s269 = smul.u32 2, %s23
        %p270 = scmp.eq.s32.totalorder %s23, 0
        // Predicated region
        $region37: #{tpu_custom_call.1} parent=35 // pred_check
          %p271 = pneg %p270
        $region38: #{tpu_custom_call.1} parent=35 // pred_check_branch
          %273 = sbr.rel (%p271) target = $region40
        $region39: #{tpu_custom_call.1} parent=35 // pred_region
          %274 = vst [vmem:[%s247] sm:$0xff] 0.0
          %275 = vst [vmem:[%s247 + $0x8] sm:$0xff] 0.0
        $region40: #{tpu_custom_call.1} parent=35 // pred_fallthru
          _
        %v276 = vld [vmem:[%s252] sm:$0xff]
        %v277 = vld [vmem:[%s252 + $0x8] sm:$0xff]
        %v278 = vld [vmem:[%s252 + $0x10] sm:$0xff]
        %v279 = vld [vmem:[%s252 + $0x18] sm:$0xff]
        %v280 = vld [vmem:[%s252 + $0x20] sm:$0xff]
        %v281 = vld [vmem:[%s252 + $0x28] sm:$0xff]
        %v282 = vld [vmem:[%s252 + $0x30] sm:$0xff]
        %v283 = vld [vmem:[%s252 + $0x38] sm:$0xff]
        %v284 = vld [vmem:[%s252 + $0x40] sm:$0xff]
        %v285 = vld [vmem:[%s252 + $0x48] sm:$0xff]
        %v286 = vld [vmem:[%s252 + $0x50] sm:$0xff]
        %v287 = vld [vmem:[%s252 + $0x58] sm:$0xff]
        %v288 = vld [vmem:[%s252 + $0x60] sm:$0xff]
        %v289 = vld [vmem:[%s252 + $0x68] sm:$0xff]
        %v290 = vld [vmem:[%s252 + $0x70] sm:$0xff]
        %v291 = vld [vmem:[%s252 + $0x78] sm:$0xff]
        %v292 = vld [vmem:[%s252 + $0x80] sm:$0xff]
        %v293 = vld [vmem:[%s252 + $0x88] sm:$0xff]
        %v294 = vld [vmem:[%s252 + $0x90] sm:$0xff]
        %v295 = vld [vmem:[%s252 + $0x98] sm:$0xff]
        %v296 = vld [vmem:[%s252 + $0xa0] sm:$0xff]
        %v297 = vld [vmem:[%s252 + $0xa8] sm:$0xff]
        %v298 = vld [vmem:[%s252 + $0xb0] sm:$0xff]
        %v299 = vld [vmem:[%s252 + $0xb8] sm:$0xff]
        %v300 = vld [vmem:[%s252 + $0xc0] sm:$0xff]
        %v301 = vld [vmem:[%s252 + $0xc8] sm:$0xff]
        %v302 = vld [vmem:[%s252 + $0xd0] sm:$0xff]
        %v303 = vld [vmem:[%s252 + $0xd8] sm:$0xff]
        %v304 = vld [vmem:[%s252 + $0xe0] sm:$0xff]
        %v305 = vld [vmem:[%s252 + $0xe8] sm:$0xff]
        %v306 = vld [vmem:[%s252 + $0xf0] sm:$0xff]
        %v307 = vld [vmem:[%s252 + $0xf8] sm:$0xff]
        %v308 = vld [vmem:[%s258] sm:$0xff]
        %v309 = vld [vmem:[%s258 + $0x8] sm:$0xff]
        %v310 = vld [vmem:[%s258 + $0x10] sm:$0xff]
        %v311 = vld [vmem:[%s258 + $0x18] sm:$0xff]
        %v312 = vld [vmem:[%s258 + $0x20] sm:$0xff]
        %v313 = vld [vmem:[%s258 + $0x28] sm:$0xff]
        %v314 = vld [vmem:[%s258 + $0x30] sm:$0xff]
        %v315 = vld [vmem:[%s258 + $0x38] sm:$0xff]
        %v316 = vld [vmem:[%s258 + $0x40] sm:$0xff]
        %v317 = vld [vmem:[%s258 + $0x48] sm:$0xff]
        %v318 = vld [vmem:[%s258 + $0x50] sm:$0xff]
        %v319 = vld [vmem:[%s258 + $0x58] sm:$0xff]
        %v320 = vld [vmem:[%s258 + $0x60] sm:$0xff]
        %v321 = vld [vmem:[%s258 + $0x68] sm:$0xff]
        %v322 = vld [vmem:[%s258 + $0x70] sm:$0xff]
        %v323 = vld [vmem:[%s258 + $0x78] sm:$0xff]
        %v324 = vld [vmem:[%s258 + $0x80] sm:$0xff]
        %v325 = vld [vmem:[%s258 + $0x88] sm:$0xff]
        %v326 = vld [vmem:[%s258 + $0x90] sm:$0xff]
        %v327 = vld [vmem:[%s258 + $0x98] sm:$0xff]
        %v328 = vld [vmem:[%s258 + $0xa0] sm:$0xff]
        %v329 = vld [vmem:[%s258 + $0xa8] sm:$0xff]
        %v330 = vld [vmem:[%s258 + $0xb0] sm:$0xff]
        %v331 = vld [vmem:[%s258 + $0xb8] sm:$0xff]
        %v332 = vld [vmem:[%s258 + $0xc0] sm:$0xff]
        %v333 = vld [vmem:[%s258 + $0xc8] sm:$0xff]
        %v334 = vld [vmem:[%s258 + $0xd0] sm:$0xff]
        %v335 = vld [vmem:[%s258 + $0xd8] sm:$0xff]
        %v336 = vld [vmem:[%s258 + $0xe0] sm:$0xff]
        %v337 = vld [vmem:[%s258 + $0xe8] sm:$0xff]
        %v338 = vld [vmem:[%s258 + $0xf0] sm:$0xff]
        %v339 = vld [vmem:[%s258 + $0xf8] sm:$0xff]
        %v340 = vld [vmem:[%s263] sm:$0x3]
        %v341 = vld [vmem:[%s268] sm:$0x3]
        %v342 = vadd.f32 %v276, 1.0
        %v343 = vadd.f32 %v277, 1.0
        %v344 = vadd.f32 %v278, 1.0
        %v345 = vadd.f32 %v279, 1.0
        %v346 = vadd.f32 %v280, 1.0
        %v347 = vadd.f32 %v281, 1.0
        %v348 = vadd.f32 %v282, 1.0
        %v349 = vadd.f32 %v283, 1.0
        %v350 = vadd.f32 %v284, 1.0
        %v351 = vadd.f32 %v285, 1.0
        %v352 = vadd.f32 %v286, 1.0
        %v353 = vadd.f32 %v287, 1.0
        %v354 = vadd.f32 %v288, 1.0
        %v355 = vadd.f32 %v289, 1.0
        %v356 = vadd.f32 %v290, 1.0
        %v357 = vadd.f32 %v291, 1.0
        %v358 = vadd.f32 %v292, 1.0
        %v359 = vadd.f32 %v293, 1.0
        %v360 = vadd.f32 %v294, 1.0
        %v361 = vadd.f32 %v295, 1.0
        %v362 = vadd.f32 %v296, 1.0
        %v363 = vadd.f32 %v297, 1.0
        %v364 = vadd.f32 %v298, 1.0
        %v365 = vadd.f32 %v299, 1.0
        %v366 = vadd.f32 %v300, 1.0
        %v367 = vadd.f32 %v301, 1.0
        %v368 = vadd.f32 %v302, 1.0
        %v369 = vadd.f32 %v303, 1.0
        %v370 = vadd.f32 %v304, 1.0
        %v371 = vadd.f32 %v305, 1.0
        %v372 = vadd.f32 %v306, 1.0
        %v373 = vadd.f32 %v307, 1.0
        %v374 = vsub.f32 %v276, 1.0
        %v375 = vsub.f32 %v277, 1.0
        %v376 = vsub.f32 %v278, 1.0
        %v377 = vsub.f32 %v279, 1.0
        %v378 = vsub.f32 %v280, 1.0
        %v379 = vsub.f32 %v281, 1.0
        %v380 = vsub.f32 %v282, 1.0
        %v381 = vsub.f32 %v283, 1.0
        %v382 = vsub.f32 %v284, 1.0
        %v383 = vsub.f32 %v285, 1.0
        %v384 = vsub.f32 %v286, 1.0
        %v385 = vsub.f32 %v287, 1.0
        %v386 = vsub.f32 %v288, 1.0
        %v387 = vsub.f32 %v289, 1.0
        %v388 = vsub.f32 %v290, 1.0
        %v389 = vsub.f32 %v291, 1.0
        %v390 = vsub.f32 %v292, 1.0
        %v391 = vsub.f32 %v293, 1.0
        %v392 = vsub.f32 %v294, 1.0
        %v393 = vsub.f32 %v295, 1.0
        %v394 = vsub.f32 %v296, 1.0
        %v395 = vsub.f32 %v297, 1.0
        %v396 = vsub.f32 %v298, 1.0
        %v397 = vsub.f32 %v299, 1.0
        %v398 = vsub.f32 %v300, 1.0
        %v399 = vsub.f32 %v301, 1.0
        %v400 = vsub.f32 %v302, 1.0
        %v401 = vsub.f32 %v303, 1.0
        %v402 = vsub.f32 %v304, 1.0
        %v403 = vsub.f32 %v305, 1.0
        %v404 = vsub.f32 %v306, 1.0
        %v405 = vsub.f32 %v307, 1.0
        %v407 = vperm.slane %v341, 0
        %v408 = vperm.slane %v341, 1
        %412 = vset.pattern.permute.xlu0 0
        %413 = vperm.xlu0 %412, %v308
        %v414 = vpop.permute.xlu0 %413
        %417 = vset.pattern.permute.xlu0 0
        %418 = vperm.xlu0 %417, %v309
        %v419 = vpop.permute.xlu0 %418
        %422 = vset.pattern.permute.xlu0 0
        %423 = vperm.xlu0 %422, %v310
        %v424 = vpop.permute.xlu0 %423
        %427 = vset.pattern.permute.xlu0 0
        %428 = vperm.xlu0 %427, %v311
        %v429 = vpop.permute.xlu0 %428
        %432 = vset.pattern.permute.xlu0 0
        %433 = vperm.xlu0 %432, %v312
        %v434 = vpop.permute.xlu0 %433
        %437 = vset.pattern.permute.xlu0 0
        %438 = vperm.xlu0 %437, %v313
        %v439 = vpop.permute.xlu0 %438
        %442 = vset.pattern.permute.xlu0 0
        %443 = vperm.xlu0 %442, %v314
        %v444 = vpop.permute.xlu0 %443
        %447 = vset.pattern.permute.xlu0 0
        %448 = vperm.xlu0 %447, %v315
        %v449 = vpop.permute.xlu0 %448
        %452 = vset.pattern.permute.xlu0 0
        %453 = vperm.xlu0 %452, %v316
        %v454 = vpop.permute.xlu0 %453
        %457 = vset.pattern.permute.xlu0 0
        %458 = vperm.xlu0 %457, %v317
        %v459 = vpop.permute.xlu0 %458
        %462 = vset.pattern.permute.xlu0 0
        %463 = vperm.xlu0 %462, %v318
        %v464 = vpop.permute.xlu0 %463
        %467 = vset.pattern.permute.xlu0 0
        %468 = vperm.xlu0 %467, %v319
        %v469 = vpop.permute.xlu0 %468
        %472 = vset.pattern.permute.xlu0 0
        %473 = vperm.xlu0 %472, %v320
        %v474 = vpop.permute.xlu0 %473
        %477 = vset.pattern.permute.xlu0 0
        %478 = vperm.xlu0 %477, %v321
        %v479 = vpop.permute.xlu0 %478
        %482 = vset.pattern.permute.xlu0 0
        %483 = vperm.xlu0 %482, %v322
        %v484 = vpop.permute.xlu0 %483
        %487 = vset.pattern.permute.xlu0 0
        %488 = vperm.xlu0 %487, %v323
        %v489 = vpop.permute.xlu0 %488
        %492 = vset.pattern.permute.xlu0 0
        %493 = vperm.xlu0 %492, %v324
        %v494 = vpop.permute.xlu0 %493
        %497 = vset.pattern.permute.xlu0 0
        %498 = vperm.xlu0 %497, %v325
        %v499 = vpop.permute.xlu0 %498
        %502 = vset.pattern.permute.xlu0 0
        %503 = vperm.xlu0 %502, %v326
        %v504 = vpop.permute.xlu0 %503
        %507 = vset.pattern.permute.xlu0 0
        %508 = vperm.xlu0 %507, %v327
        %v509 = vpop.permute.xlu0 %508
        %512 = vset.pattern.permute.xlu0 0
        %513 = vperm.xlu0 %512, %v328
        %v514 = vpop.permute.xlu0 %513
        %517 = vset.pattern.permute.xlu0 0
        %518 = vperm.xlu0 %517, %v329
        %v519 = vpop.permute.xlu0 %518
        %522 = vset.pattern.permute.xlu0 0
        %523 = vperm.xlu0 %522, %v330
        %v524 = vpop.permute.xlu0 %523
        %527 = vset.pattern.permute.xlu0 0
        %528 = vperm.xlu0 %527, %v331
        %v529 = vpop.permute.xlu0 %528
        %532 = vset.pattern.permute.xlu0 0
        %533 = vperm.xlu0 %532, %v332
        %v534 = vpop.permute.xlu0 %533
        %537 = vset.pattern.permute.xlu0 0
        %538 = vperm.xlu0 %537, %v333
        %v539 = vpop.permute.xlu0 %538
        %542 = vset.pattern.permute.xlu0 0
        %543 = vperm.xlu0 %542, %v334
        %v544 = vpop.permute.xlu0 %543
        %547 = vset.pattern.permute.xlu0 0
        %548 = vperm.xlu0 %547, %v335
        %v549 = vpop.permute.xlu0 %548
        %552 = vset.pattern.permute.xlu0 0
        %553 = vperm.xlu0 %552, %v336
        %v554 = vpop.permute.xlu0 %553
        %557 = vset.pattern.permute.xlu0 0
        %558 = vperm.xlu0 %557, %v337
        %v559 = vpop.permute.xlu0 %558
        %562 = vset.pattern.permute.xlu0 0
        %563 = vperm.xlu0 %562, %v338
        %v564 = vpop.permute.xlu0 %563
        %567 = vset.pattern.permute.xlu0 0
        %568 = vperm.xlu0 %567, %v339
        %v569 = vpop.permute.xlu0 %568
        %vm571 = vcmp.gt.f32.partialorder %v407, %v414
        %vm572 = vcmp.gt.f32.partialorder %v408, %v414
        %vm573 = vcmp.gt.f32.partialorder %v407, %v419
        %vm574 = vcmp.gt.f32.partialorder %v408, %v419
        %vm575 = vcmp.gt.f32.partialorder %v407, %v424
        %vm576 = vcmp.gt.f32.partialorder %v408, %v424
        %vm577 = vcmp.gt.f32.partialorder %v407, %v429
        %vm578 = vcmp.gt.f32.partialorder %v408, %v429
        %vm579 = vcmp.gt.f32.partialorder %v407, %v434
        %vm580 = vcmp.gt.f32.partialorder %v408, %v434
        %vm581 = vcmp.gt.f32.partialorder %v407, %v439
        %vm582 = vcmp.gt.f32.partialorder %v408, %v439
        %vm583 = vcmp.gt.f32.partialorder %v407, %v444
        %vm584 = vcmp.gt.f32.partialorder %v408, %v444
        %vm585 = vcmp.gt.f32.partialorder %v407, %v449
        %vm586 = vcmp.gt.f32.partialorder %v408, %v449
        %vm587 = vcmp.gt.f32.partialorder %v407, %v454
        %vm588 = vcmp.gt.f32.partialorder %v408, %v454
        %vm589 = vcmp.gt.f32.partialorder %v407, %v459
        %vm590 = vcmp.gt.f32.partialorder %v408, %v459
        %vm591 = vcmp.gt.f32.partialorder %v407, %v464
        %vm592 = vcmp.gt.f32.partialorder %v408, %v464
        %vm593 = vcmp.gt.f32.partialorder %v407, %v469
        %vm594 = vcmp.gt.f32.partialorder %v408, %v469
        %vm595 = vcmp.gt.f32.partialorder %v407, %v474
        %vm596 = vcmp.gt.f32.partialorder %v408, %v474
        %vm597 = vcmp.gt.f32.partialorder %v407, %v479
        %vm598 = vcmp.gt.f32.partialorder %v408, %v479
        %vm599 = vcmp.gt.f32.partialorder %v407, %v484
        %vm600 = vcmp.gt.f32.partialorder %v408, %v484
        %vm601 = vcmp.gt.f32.partialorder %v407, %v489
        %vm602 = vcmp.gt.f32.partialorder %v408, %v489
        %vm603 = vcmp.gt.f32.partialorder %v407, %v494
        %vm604 = vcmp.gt.f32.partialorder %v408, %v494
        %vm605 = vcmp.gt.f32.partialorder %v407, %v499
        %vm606 = vcmp.gt.f32.partialorder %v408, %v499
        %vm607 = vcmp.gt.f32.partialorder %v407, %v504
        %vm608 = vcmp.gt.f32.partialorder %v408, %v504
        %vm609 = vcmp.gt.f32.partialorder %v407, %v509
        %vm610 = vcmp.gt.f32.partialorder %v408, %v509
        %vm611 = vcmp.gt.f32.partialorder %v407, %v514
        %vm612 = vcmp.gt.f32.partialorder %v408, %v514
        %vm613 = vcmp.gt.f32.partialorder %v407, %v519
        %vm614 = vcmp.gt.f32.partialorder %v408, %v519
        %vm615 = vcmp.gt.f32.partialorder %v407, %v524
        %vm616 = vcmp.gt.f32.partialorder %v408, %v524
        %vm617 = vcmp.gt.f32.partialorder %v407, %v529
        %vm618 = vcmp.gt.f32.partialorder %v408, %v529
        %vm619 = vcmp.gt.f32.partialorder %v407, %v534
        %vm620 = vcmp.gt.f32.partialorder %v408, %v534
        %vm621 = vcmp.gt.f32.partialorder %v407, %v539
        %vm622 = vcmp.gt.f32.partialorder %v408, %v539
        %vm623 = vcmp.gt.f32.partialorder %v407, %v544
        %vm624 = vcmp.gt.f32.partialorder %v408, %v544
        %vm625 = vcmp.gt.f32.partialorder %v407, %v549
        %vm626 = vcmp.gt.f32.partialorder %v408, %v549
        %vm627 = vcmp.gt.f32.partialorder %v407, %v554
        %vm628 = vcmp.gt.f32.partialorder %v408, %v554
        %vm629 = vcmp.gt.f32.partialorder %v407, %v559
        %vm630 = vcmp.gt.f32.partialorder %v408, %v559
        %vm631 = vcmp.gt.f32.partialorder %v407, %v564
        %vm632 = vcmp.gt.f32.partialorder %v408, %v564
        %vm633 = vcmp.gt.f32.partialorder %v407, %v569
        %vm634 = vcmp.gt.f32.partialorder %v408, %v569
        %636 = vset.pattern.permute.xlu0 0
        %637 = vperm.xlu0 %636, %v342
        %v638 = vpop.permute.xlu0 %637
        %641 = vset.pattern.permute.xlu0 0
        %642 = vperm.xlu0 %641, %v343
        %v643 = vpop.permute.xlu0 %642
        %646 = vset.pattern.permute.xlu0 0
        %647 = vperm.xlu0 %646, %v344
        %v648 = vpop.permute.xlu0 %647
        %651 = vset.pattern.permute.xlu0 0
        %652 = vperm.xlu0 %651, %v345
        %v653 = vpop.permute.xlu0 %652
        %656 = vset.pattern.permute.xlu0 0
        %657 = vperm.xlu0 %656, %v346
        %v658 = vpop.permute.xlu0 %657
        %661 = vset.pattern.permute.xlu0 0
        %662 = vperm.xlu0 %661, %v347
        %v663 = vpop.permute.xlu0 %662
        %666 = vset.pattern.permute.xlu0 0
        %667 = vperm.xlu0 %666, %v348
        %v668 = vpop.permute.xlu0 %667
        %671 = vset.pattern.permute.xlu0 0
        %672 = vperm.xlu0 %671, %v349
        %v673 = vpop.permute.xlu0 %672
        %676 = vset.pattern.permute.xlu0 0
        %677 = vperm.xlu0 %676, %v350
        %v678 = vpop.permute.xlu0 %677
        %681 = vset.pattern.permute.xlu0 0
        %682 = vperm.xlu0 %681, %v351
        %v683 = vpop.permute.xlu0 %682
        %686 = vset.pattern.permute.xlu0 0
        %687 = vperm.xlu0 %686, %v352
        %v688 = vpop.permute.xlu0 %687
        %691 = vset.pattern.permute.xlu0 0
        %692 = vperm.xlu0 %691, %v353
        %v693 = vpop.permute.xlu0 %692
        %696 = vset.pattern.permute.xlu0 0
        %697 = vperm.xlu0 %696, %v354
        %v698 = vpop.permute.xlu0 %697
        %701 = vset.pattern.permute.xlu0 0
        %702 = vperm.xlu0 %701, %v355
        %v703 = vpop.permute.xlu0 %702
        %706 = vset.pattern.permute.xlu0 0
        %707 = vperm.xlu0 %706, %v356
        %v708 = vpop.permute.xlu0 %707
        %711 = vset.pattern.permute.xlu0 0
        %712 = vperm.xlu0 %711, %v357
        %v713 = vpop.permute.xlu0 %712
        %716 = vset.pattern.permute.xlu0 0
        %717 = vperm.xlu0 %716, %v358
        %v718 = vpop.permute.xlu0 %717
        %721 = vset.pattern.permute.xlu0 0
        %722 = vperm.xlu0 %721, %v359
        %v723 = vpop.permute.xlu0 %722
        %726 = vset.pattern.permute.xlu0 0
        %727 = vperm.xlu0 %726, %v360
        %v728 = vpop.permute.xlu0 %727
        %731 = vset.pattern.permute.xlu0 0
        %732 = vperm.xlu0 %731, %v361
        %v733 = vpop.permute.xlu0 %732
        %736 = vset.pattern.permute.xlu0 0
        %737 = vperm.xlu0 %736, %v362
        %v738 = vpop.permute.xlu0 %737
        %741 = vset.pattern.permute.xlu0 0
        %742 = vperm.xlu0 %741, %v363
        %v743 = vpop.permute.xlu0 %742
        %746 = vset.pattern.permute.xlu0 0
        %747 = vperm.xlu0 %746, %v364
        %v748 = vpop.permute.xlu0 %747
        %751 = vset.pattern.permute.xlu0 0
        %752 = vperm.xlu0 %751, %v365
        %v753 = vpop.permute.xlu0 %752
        %756 = vset.pattern.permute.xlu0 0
        %757 = vperm.xlu0 %756, %v366
        %v758 = vpop.permute.xlu0 %757
        %761 = vset.pattern.permute.xlu0 0
        %762 = vperm.xlu0 %761, %v367
        %v763 = vpop.permute.xlu0 %762
        %766 = vset.pattern.permute.xlu0 0
        %767 = vperm.xlu0 %766, %v368
        %v768 = vpop.permute.xlu0 %767
        %771 = vset.pattern.permute.xlu0 0
        %772 = vperm.xlu0 %771, %v369
        %v773 = vpop.permute.xlu0 %772
        %776 = vset.pattern.permute.xlu0 0
        %777 = vperm.xlu0 %776, %v370
        %v778 = vpop.permute.xlu0 %777
        %781 = vset.pattern.permute.xlu0 0
        %782 = vperm.xlu0 %781, %v371
        %v783 = vpop.permute.xlu0 %782
        %786 = vset.pattern.permute.xlu0 0
        %787 = vperm.xlu0 %786, %v372
        %v788 = vpop.permute.xlu0 %787
        %791 = vset.pattern.permute.xlu0 0
        %792 = vperm.xlu0 %791, %v373
        %v793 = vpop.permute.xlu0 %792
        %v796 = vperm.slane %v340, 0
        %v797 = vperm.slane %v340, 1
        %v800 = vsub.f32 %v638, %v796
        %v801 = vsub.f32 %v638, %v797
        %v802 = vsub.f32 %v643, %v796
        %v803 = vsub.f32 %v643, %v797
        %v804 = vsub.f32 %v648, %v796
        %v805 = vsub.f32 %v648, %v797
        %v806 = vsub.f32 %v653, %v796
        %v807 = vsub.f32 %v653, %v797
        %v808 = vsub.f32 %v658, %v796
        %v809 = vsub.f32 %v658, %v797
        %v810 = vsub.f32 %v663, %v796
        %v811 = vsub.f32 %v663, %v797
        %v812 = vsub.f32 %v668, %v796
        %v813 = vsub.f32 %v668, %v797
        %v814 = vsub.f32 %v673, %v796
        %v815 = vsub.f32 %v673, %v797
        %v816 = vsub.f32 %v678, %v796
        %v817 = vsub.f32 %v678, %v797
        %v818 = vsub.f32 %v683, %v796
        %v819 = vsub.f32 %v683, %v797
        %v820 = vsub.f32 %v688, %v796
        %v821 = vsub.f32 %v688, %v797
        %v822 = vsub.f32 %v693, %v796
        %v823 = vsub.f32 %v693, %v797
        %v824 = vsub.f32 %v698, %v796
        %v825 = vsub.f32 %v698, %v797
        %v826 = vsub.f32 %v703, %v796
        %v827 = vsub.f32 %v703, %v797
        %v828 = vsub.f32 %v708, %v796
        %v829 = vsub.f32 %v708, %v797
        %v830 = vsub.f32 %v713, %v796
        %v831 = vsub.f32 %v713, %v797
        %v832 = vsub.f32 %v718, %v796
        %v833 = vsub.f32 %v718, %v797
        %v834 = vsub.f32 %v723, %v796
        %v835 = vsub.f32 %v723, %v797
        %v836 = vsub.f32 %v728, %v796
        %v837 = vsub.f32 %v728, %v797
        %v838 = vsub.f32 %v733, %v796
        %v839 = vsub.f32 %v733, %v797
        %v840 = vsub.f32 %v738, %v796
        %v841 = vsub.f32 %v738, %v797
        %v842 = vsub.f32 %v743, %v796
        %v843 = vsub.f32 %v743, %v797
        %v844 = vsub.f32 %v748, %v796
        %v845 = vsub.f32 %v748, %v797
        %v846 = vsub.f32 %v753, %v796
        %v847 = vsub.f32 %v753, %v797
        %v848 = vsub.f32 %v758, %v796
        %v849 = vsub.f32 %v758, %v797
        %v850 = vsub.f32 %v763, %v796
        %v851 = vsub.f32 %v763, %v797
        %v852 = vsub.f32 %v768, %v796
        %v853 = vsub.f32 %v768, %v797
        %v854 = vsub.f32 %v773, %v796
        %v855 = vsub.f32 %v773, %v797
        %v856 = vsub.f32 %v778, %v796
        %v857 = vsub.f32 %v778, %v797
        %v858 = vsub.f32 %v783, %v796
        %v859 = vsub.f32 %v783, %v797
        %v860 = vsub.f32 %v788, %v796
        %v861 = vsub.f32 %v788, %v797
        %v862 = vsub.f32 %v793, %v796
        %v863 = vsub.f32 %v793, %v797
        %865 = vset.pattern.permute.xlu0 0
        %866 = vperm.xlu0 %865, %v374
        %v867 = vpop.permute.xlu0 %866
        %870 = vset.pattern.permute.xlu0 0
        %871 = vperm.xlu0 %870, %v375
        %v872 = vpop.permute.xlu0 %871
        %875 = vset.pattern.permute.xlu0 0
        %876 = vperm.xlu0 %875, %v376
        %v877 = vpop.permute.xlu0 %876
        %880 = vset.pattern.permute.xlu0 0
        %881 = vperm.xlu0 %880, %v377
        %v882 = vpop.permute.xlu0 %881
        %885 = vset.pattern.permute.xlu0 0
        %886 = vperm.xlu0 %885, %v378
        %v887 = vpop.permute.xlu0 %886
        %890 = vset.pattern.permute.xlu0 0
        %891 = vperm.xlu0 %890, %v379
        %v892 = vpop.permute.xlu0 %891
        %895 = vset.pattern.permute.xlu0 0
        %896 = vperm.xlu0 %895, %v380
        %v897 = vpop.permute.xlu0 %896
        %900 = vset.pattern.permute.xlu0 0
        %901 = vperm.xlu0 %900, %v381
        %v902 = vpop.permute.xlu0 %901
        %905 = vset.pattern.permute.xlu0 0
        %906 = vperm.xlu0 %905, %v382
        %v907 = vpop.permute.xlu0 %906
        %910 = vset.pattern.permute.xlu0 0
        %911 = vperm.xlu0 %910, %v383
        %v912 = vpop.permute.xlu0 %911
        %915 = vset.pattern.permute.xlu0 0
        %916 = vperm.xlu0 %915, %v384
        %v917 = vpop.permute.xlu0 %916
        %920 = vset.pattern.permute.xlu0 0
        %921 = vperm.xlu0 %920, %v385
        %v922 = vpop.permute.xlu0 %921
        %925 = vset.pattern.permute.xlu0 0
        %926 = vperm.xlu0 %925, %v386
        %v927 = vpop.permute.xlu0 %926
        %930 = vset.pattern.permute.xlu0 0
        %931 = vperm.xlu0 %930, %v387
        %v932 = vpop.permute.xlu0 %931
        %935 = vset.pattern.permute.xlu0 0
        %936 = vperm.xlu0 %935, %v388
        %v937 = vpop.permute.xlu0 %936
        %940 = vset.pattern.permute.xlu0 0
        %941 = vperm.xlu0 %940, %v389
        %v942 = vpop.permute.xlu0 %941
        %945 = vset.pattern.permute.xlu0 0
        %946 = vperm.xlu0 %945, %v390
        %v947 = vpop.permute.xlu0 %946
        %950 = vset.pattern.permute.xlu0 0
        %951 = vperm.xlu0 %950, %v391
        %v952 = vpop.permute.xlu0 %951
        %955 = vset.pattern.permute.xlu0 0
        %956 = vperm.xlu0 %955, %v392
        %v957 = vpop.permute.xlu0 %956
        %960 = vset.pattern.permute.xlu0 0
        %961 = vperm.xlu0 %960, %v393
        %v962 = vpop.permute.xlu0 %961
        %965 = vset.pattern.permute.xlu0 0
        %966 = vperm.xlu0 %965, %v394
        %v967 = vpop.permute.xlu0 %966
        %970 = vset.pattern.permute.xlu0 0
        %971 = vperm.xlu0 %970, %v395
        %v972 = vpop.permute.xlu0 %971
        %975 = vset.pattern.permute.xlu0 0
        %976 = vperm.xlu0 %975, %v396
        %v977 = vpop.permute.xlu0 %976
        %980 = vset.pattern.permute.xlu0 0
        %981 = vperm.xlu0 %980, %v397
        %v982 = vpop.permute.xlu0 %981
        %985 = vset.pattern.permute.xlu0 0
        %986 = vperm.xlu0 %985, %v398
        %v987 = vpop.permute.xlu0 %986
        %990 = vset.pattern.permute.xlu0 0
        %991 = vperm.xlu0 %990, %v399
        %v992 = vpop.permute.xlu0 %991
        %995 = vset.pattern.permute.xlu0 0
        %996 = vperm.xlu0 %995, %v400
        %v997 = vpop.permute.xlu0 %996
        %1000 = vset.pattern.permute.xlu0 0
        %1001 = vperm.xlu0 %1000, %v401
        %v1002 = vpop.permute.xlu0 %1001
        %1005 = vset.pattern.permute.xlu0 0
        %1006 = vperm.xlu0 %1005, %v402
        %v1007 = vpop.permute.xlu0 %1006
        %1010 = vset.pattern.permute.xlu0 0
        %1011 = vperm.xlu0 %1010, %v403
        %v1012 = vpop.permute.xlu0 %1011
        %1015 = vset.pattern.permute.xlu0 0
        %1016 = vperm.xlu0 %1015, %v404
        %v1017 = vpop.permute.xlu0 %1016
        %1020 = vset.pattern.permute.xlu0 0
        %1021 = vperm.xlu0 %1020, %v405
        %v1022 = vpop.permute.xlu0 %1021
        %v1024 = vsub.f32 %v796, %v867
        %v1025 = vsub.f32 %v797, %v867
        %v1026 = vsub.f32 %v796, %v872
        %v1027 = vsub.f32 %v797, %v872
        %v1028 = vsub.f32 %v796, %v877
        %v1029 = vsub.f32 %v797, %v877
        %v1030 = vsub.f32 %v796, %v882
        %v1031 = vsub.f32 %v797, %v882
        %v1032 = vsub.f32 %v796, %v887
        %v1033 = vsub.f32 %v797, %v887
        %v1034 = vsub.f32 %v796, %v892
        %v1035 = vsub.f32 %v797, %v892
        %v1036 = vsub.f32 %v796, %v897
        %v1037 = vsub.f32 %v797, %v897
        %v1038 = vsub.f32 %v796, %v902
        %v1039 = vsub.f32 %v797, %v902
        %v1040 = vsub.f32 %v796, %v907
        %v1041 = vsub.f32 %v797, %v907
        %v1042 = vsub.f32 %v796, %v912
        %v1043 = vsub.f32 %v797, %v912
        %v1044 = vsub.f32 %v796, %v917
        %v1045 = vsub.f32 %v797, %v917
        %v1046 = vsub.f32 %v796, %v922
        %v1047 = vsub.f32 %v797, %v922
        %v1048 = vsub.f32 %v796, %v927
        %v1049 = vsub.f32 %v797, %v927
        %v1050 = vsub.f32 %v796, %v932
        %v1051 = vsub.f32 %v797, %v932
        %v1052 = vsub.f32 %v796, %v937
        %v1053 = vsub.f32 %v797, %v937
        %v1054 = vsub.f32 %v796, %v942
        %v1055 = vsub.f32 %v797, %v942
        %v1056 = vsub.f32 %v796, %v947
        %v1057 = vsub.f32 %v797, %v947
        %v1058 = vsub.f32 %v796, %v952
        %v1059 = vsub.f32 %v797, %v952
        %v1060 = vsub.f32 %v796, %v957
        %v1061 = vsub.f32 %v797, %v957
        %v1062 = vsub.f32 %v796, %v962
        %v1063 = vsub.f32 %v797, %v962
        %v1064 = vsub.f32 %v796, %v967
        %v1065 = vsub.f32 %v797, %v967
        %v1066 = vsub.f32 %v796, %v972
        %v1067 = vsub.f32 %v797, %v972
        %v1068 = vsub.f32 %v796, %v977
        %v1069 = vsub.f32 %v797, %v977
        %v1070 = vsub.f32 %v796, %v982
        %v1071 = vsub.f32 %v797, %v982
        %v1072 = vsub.f32 %v796, %v987
        %v1073 = vsub.f32 %v797, %v987
        %v1074 = vsub.f32 %v796, %v992
        %v1075 = vsub.f32 %v797, %v992
        %v1076 = vsub.f32 %v796, %v997
        %v1077 = vsub.f32 %v797, %v997
        %v1078 = vsub.f32 %v796, %v1002
        %v1079 = vsub.f32 %v797, %v1002
        %v1080 = vsub.f32 %v796, %v1007
        %v1081 = vsub.f32 %v797, %v1007
        %v1082 = vsub.f32 %v796, %v1012
        %v1083 = vsub.f32 %v797, %v1012
        %v1084 = vsub.f32 %v796, %v1017
        %v1085 = vsub.f32 %v797, %v1017
        %v1086 = vsub.f32 %v796, %v1022
        %v1087 = vsub.f32 %v797, %v1022
        %v1088 = vsel %vm571, %v800, %v1024
        %v1089 = vsel %vm572, %v801, %v1025
        %v1090 = vsel %vm573, %v802, %v1026
        %v1091 = vsel %vm574, %v803, %v1027
        %v1092 = vsel %vm575, %v804, %v1028
        %v1093 = vsel %vm576, %v805, %v1029
        %v1094 = vsel %vm577, %v806, %v1030
        %v1095 = vsel %vm578, %v807, %v1031
        %v1096 = vsel %vm579, %v808, %v1032
        %v1097 = vsel %vm580, %v809, %v1033
        %v1098 = vsel %vm581, %v810, %v1034
        %v1099 = vsel %vm582, %v811, %v1035
        %v1100 = vsel %vm583, %v812, %v1036
        %v1101 = vsel %vm584, %v813, %v1037
        %v1102 = vsel %vm585, %v814, %v1038
        %v1103 = vsel %vm586, %v815, %v1039
        %v1104 = vsel %vm587, %v816, %v1040
        %v1105 = vsel %vm588, %v817, %v1041
        %v1106 = vsel %vm589, %v818, %v1042
        %v1107 = vsel %vm590, %v819, %v1043
        %v1108 = vsel %vm591, %v820, %v1044
        %v1109 = vsel %vm592, %v821, %v1045
        %v1110 = vsel %vm593, %v822, %v1046
        %v1111 = vsel %vm594, %v823, %v1047
        %v1112 = vsel %vm595, %v824, %v1048
        %v1113 = vsel %vm596, %v825, %v1049
        %v1114 = vsel %vm597, %v826, %v1050
        %v1115 = vsel %vm598, %v827, %v1051
        %v1116 = vsel %vm599, %v828, %v1052
        %v1117 = vsel %vm600, %v829, %v1053
        %v1118 = vsel %vm601, %v830, %v1054
        %v1119 = vsel %vm602, %v831, %v1055
        %v1120 = vsel %vm603, %v832, %v1056
        %v1121 = vsel %vm604, %v833, %v1057
        %v1122 = vsel %vm605, %v834, %v1058
        %v1123 = vsel %vm606, %v835, %v1059
        %v1124 = vsel %vm607, %v836, %v1060
        %v1125 = vsel %vm608, %v837, %v1061
        %v1126 = vsel %vm609, %v838, %v1062
        %v1127 = vsel %vm610, %v839, %v1063
        %v1128 = vsel %vm611, %v840, %v1064
        %v1129 = vsel %vm612, %v841, %v1065
        %v1130 = vsel %vm613, %v842, %v1066
        %v1131 = vsel %vm614, %v843, %v1067
        %v1132 = vsel %vm615, %v844, %v1068
        %v1133 = vsel %vm616, %v845, %v1069
        %v1134 = vsel %vm617, %v846, %v1070
        %v1135 = vsel %vm618, %v847, %v1071
        %v1136 = vsel %vm619, %v848, %v1072
        %v1137 = vsel %vm620, %v849, %v1073
        %v1138 = vsel %vm621, %v850, %v1074
        %v1139 = vsel %vm622, %v851, %v1075
        %v1140 = vsel %vm623, %v852, %v1076
        %v1141 = vsel %vm624, %v853, %v1077
        %v1142 = vsel %vm625, %v854, %v1078
        %v1143 = vsel %vm626, %v855, %v1079
        %v1144 = vsel %vm627, %v856, %v1080
        %v1145 = vsel %vm628, %v857, %v1081
        %v1146 = vsel %vm629, %v858, %v1082
        %v1147 = vsel %vm630, %v859, %v1083
        %v1148 = vsel %vm631, %v860, %v1084
        %v1149 = vsel %vm632, %v861, %v1085
        %v1150 = vsel %vm633, %v862, %v1086
        %v1151 = vsel %vm634, %v863, %v1087
        %v1152 = vmax.f32 %v1088, 0.0
        %v1153 = vmax.f32 %v1089, 0.0
        %v1154 = vmax.f32 %v1090, 0.0
        %v1155 = vmax.f32 %v1091, 0.0
        %v1156 = vmax.f32 %v1092, 0.0
        %v1157 = vmax.f32 %v1093, 0.0
        %v1158 = vmax.f32 %v1094, 0.0
        %v1159 = vmax.f32 %v1095, 0.0
        %v1160 = vmax.f32 %v1096, 0.0
        %v1161 = vmax.f32 %v1097, 0.0
        %v1162 = vmax.f32 %v1098, 0.0
        %v1163 = vmax.f32 %v1099, 0.0
        %v1164 = vmax.f32 %v1100, 0.0
        %v1165 = vmax.f32 %v1101, 0.0
        %v1166 = vmax.f32 %v1102, 0.0
        %v1167 = vmax.f32 %v1103, 0.0
        %v1168 = vmax.f32 %v1104, 0.0
        %v1169 = vmax.f32 %v1105, 0.0
        %v1170 = vmax.f32 %v1106, 0.0
        %v1171 = vmax.f32 %v1107, 0.0
        %v1172 = vmax.f32 %v1108, 0.0
        %v1173 = vmax.f32 %v1109, 0.0
        %v1174 = vmax.f32 %v1110, 0.0
        %v1175 = vmax.f32 %v1111, 0.0
        %v1176 = vmax.f32 %v1112, 0.0
        %v1177 = vmax.f32 %v1113, 0.0
        %v1178 = vmax.f32 %v1114, 0.0
        %v1179 = vmax.f32 %v1115, 0.0
        %v1180 = vmax.f32 %v1116, 0.0
        %v1181 = vmax.f32 %v1117, 0.0
        %v1182 = vmax.f32 %v1118, 0.0
        %v1183 = vmax.f32 %v1119, 0.0
        %v1184 = vmax.f32 %v1120, 0.0
        %v1185 = vmax.f32 %v1121, 0.0
        %v1186 = vmax.f32 %v1122, 0.0
        %v1187 = vmax.f32 %v1123, 0.0
        %v1188 = vmax.f32 %v1124, 0.0
        %v1189 = vmax.f32 %v1125, 0.0
        %v1190 = vmax.f32 %v1126, 0.0
        %v1191 = vmax.f32 %v1127, 0.0
        %v1192 = vmax.f32 %v1128, 0.0
        %v1193 = vmax.f32 %v1129, 0.0
        %v1194 = vmax.f32 %v1130, 0.0
        %v1195 = vmax.f32 %v1131, 0.0
        %v1196 = vmax.f32 %v1132, 0.0
        %v1197 = vmax.f32 %v1133, 0.0
        %v1198 = vmax.f32 %v1134, 0.0
        %v1199 = vmax.f32 %v1135, 0.0
        %v1200 = vmax.f32 %v1136, 0.0
        %v1201 = vmax.f32 %v1137, 0.0
        %v1202 = vmax.f32 %v1138, 0.0
        %v1203 = vmax.f32 %v1139, 0.0
        %v1204 = vmax.f32 %v1140, 0.0
        %v1205 = vmax.f32 %v1141, 0.0
        %v1206 = vmax.f32 %v1142, 0.0
        %v1207 = vmax.f32 %v1143, 0.0
        %v1208 = vmax.f32 %v1144, 0.0
        %v1209 = vmax.f32 %v1145, 0.0
        %v1210 = vmax.f32 %v1146, 0.0
        %v1211 = vmax.f32 %v1147, 0.0
        %v1212 = vmax.f32 %v1148, 0.0
        %v1213 = vmax.f32 %v1149, 0.0
        %v1214 = vmax.f32 %v1150, 0.0
        %v1215 = vmax.f32 %v1151, 0.0
        %s1216 = smul.u32 %s22, 256
        %s1217 = smul.u32 %s23, 256
        %s1218 = sadd.s32 %s1216, 256
        %p1219 = scmp.le.s32.totalorder %s1218, 800
        %s1220 = sadd.s32 %s1217, 256
        %p1221 = scmp.le.s32.totalorder %s1220, 800
        %p1222 = pnand %p1219, %p1221
        %p1223 = pneg %p1222
        // Predicated region
        $region41: #{tpu_custom_call.1} parent=35 // pred_check
          _
        $region42: #{tpu_custom_call.1} parent=35 // pred_check_branch
          %1225 = sbr.rel (%p1222) target = $region44
        $region43: #{tpu_custom_call.1} parent=35 // pred_region
          %v1226 = vld [vmem:[%s247] sm:$0xff]
          %v1227 = vld [vmem:[%s247 + $0x8] sm:$0xff]
          %1228 = vmatpush.msra.mxu0 %v1182
          %1229 = vmatpush.msra.mxu0 %v1180
          %1230 = vmatpush.msra.mxu0 %v1178
          %1231 = vmatpush.msra.mxu0 %v1176
          %1232 = vmatpush.msra.mxu0 %v1174
          %1233 = vmatpush.msra.mxu0 %v1172
          %1234 = vmatpush.msra.mxu0 %v1170
          %1235 = vmatpush.msra.mxu0 %v1168
          %1236 = vmatpush.msra.mxu0 %v1166
          %1237 = vmatpush.msra.mxu0 %v1164
          %1238 = vmatpush.msra.mxu0 %v1162
          %1239 = vmatpush.msra.mxu0 %v1160
          %1240 = vmatpush.msra.mxu0 %v1158
          %1241 = vmatpush.msra.mxu0 %v1156
          %1242 = vmatpush.msra.mxu0 %v1154
          %1243 = vmatpush.msra.mxu0 %v1152
          %1244 = vmatmul.f32.gmra.mxu0 1.0
          %v1245 = vpop.f32.mrf.mxu0
          %v1246 = vadd.f32 0.0, %v1245
          %1247 = vdwg.mxu0
          %1248 = vmatpush.msra.mxu0 %v1214
          %1249 = vmatpush.msra.mxu0 %v1212
          %1250 = vmatpush.msra.mxu0 %v1210
          %1251 = vmatpush.msra.mxu0 %v1208
          %1252 = vmatpush.msra.mxu0 %v1206
          %1253 = vmatpush.msra.mxu0 %v1204
          %1254 = vmatpush.msra.mxu0 %v1202
          %1255 = vmatpush.msra.mxu0 %v1200
          %1256 = vmatpush.msra.mxu0 %v1198
          %1257 = vmatpush.msra.mxu0 %v1196
          %1258 = vmatpush.msra.mxu0 %v1194
          %1259 = vmatpush.msra.mxu0 %v1192
          %1260 = vmatpush.msra.mxu0 %v1190
          %1261 = vmatpush.msra.mxu0 %v1188
          %1262 = vmatpush.msra.mxu0 %v1186
          %1263 = vmatpush.msra.mxu0 %v1184
          %1264 = vmatmul.f32.gmra.mxu0 1.0
          %v1265 = vpop.f32.mrf.mxu0
          %v1266 = vadd.f32 %v1246, %v1265
          %1267 = vdwg.mxu0
          %1268 = vmatpush.msra.mxu0 %v1183
          %1269 = vmatpush.msra.mxu0 %v1181
          %1270 = vmatpush.msra.mxu0 %v1179
          %1271 = vmatpush.msra.mxu0 %v1177
          %1272 = vmatpush.msra.mxu0 %v1175
          %1273 = vmatpush.msra.mxu0 %v1173
          %1274 = vmatpush.msra.mxu0 %v1171
          %1275 = vmatpush.msra.mxu0 %v1169
          %1276 = vmatpush.msra.mxu0 %v1167
          %1277 = vmatpush.msra.mxu0 %v1165
          %1278 = vmatpush.msra.mxu0 %v1163
          %1279 = vmatpush.msra.mxu0 %v1161
          %1280 = vmatpush.msra.mxu0 %v1159
          %1281 = vmatpush.msra.mxu0 %v1157
          %1282 = vmatpush.msra.mxu0 %v1155
          %1283 = vmatpush.msra.mxu0 %v1153
          %1284 = vmatmul.f32.gmra.mxu0 1.0
          %v1285 = vpop.f32.mrf.mxu0
          %v1286 = vadd.f32 0.0, %v1285
          %1287 = vdwg.mxu0
          %1288 = vmatpush.msra.mxu0 %v1215
          %1289 = vmatpush.msra.mxu0 %v1213
          %1290 = vmatpush.msra.mxu0 %v1211
          %1291 = vmatpush.msra.mxu0 %v1209
          %1292 = vmatpush.msra.mxu0 %v1207
          %1293 = vmatpush.msra.mxu0 %v1205
          %1294 = vmatpush.msra.mxu0 %v1203
          %1295 = vmatpush.msra.mxu0 %v1201
          %1296 = vmatpush.msra.mxu0 %v1199
          %1297 = vmatpush.msra.mxu0 %v1197
          %1298 = vmatpush.msra.mxu0 %v1195
          %1299 = vmatpush.msra.mxu0 %v1193
          %1300 = vmatpush.msra.mxu0 %v1191
          %1301 = vmatpush.msra.mxu0 %v1189
          %1302 = vmatpush.msra.mxu0 %v1187
          %1303 = vmatpush.msra.mxu0 %v1185
          %1304 = vmatmul.f32.gmra.mxu0 1.0
          %v1305 = vpop.f32.mrf.mxu0
          %v1306 = vadd.f32 %v1286, %v1305
          %1307 = vdwg.mxu0
          %v1308 = vadd.f32 %v1226, %v1266
          %v1309 = vadd.f32 %v1227, %v1306
          %1310 = vst [vmem:[%s247] sm:$0xff] %v1308
          %1311 = vst [vmem:[%s247 + $0x8] sm:$0xff] %v1309
        $region44: #{tpu_custom_call.1} parent=35 // pred_fallthru
          _
        %p1312 = pneg %p1223
        // Predicated region
        $region45: #{tpu_custom_call.1} parent=35 // pred_check
          _
        $region46: #{tpu_custom_call.1} parent=35 // pred_check_branch
          %1314 = sbr.rel (%p1223) target = $region48
        $region47: #{tpu_custom_call.1} parent=35 // pred_region
          %v1315 = vlaneseq
          %v1316 = vshrl.u32 %v1315, 7
          %v1317 = vadd.s32 %v1316, 8
          %v1318 = vadd.s32 %v1316, 16
          %v1319 = vadd.s32 %v1316, 24
          %v1320 = vadd.s32 %v1316, 32
          %v1321 = vadd.s32 %v1316, 40
          %v1322 = vadd.s32 %v1316, 48
          %v1323 = vadd.s32 %v1316, 56
          %v1324 = vadd.s32 %v1316, 64
          %v1325 = vadd.s32 %v1316, 72
          %v1326 = vadd.s32 %v1316, 80
          %v1327 = vadd.s32 %v1316, 88
          %v1328 = vadd.s32 %v1316, 96
          %v1329 = vadd.s32 %v1316, 104
          %v1330 = vadd.s32 %v1316, 112
          %v1331 = vadd.s32 %v1316, 120
          %v1332 = vadd.s32 %v1316, 128
          %v1333 = vadd.s32 %v1316, 136
          %v1334 = vadd.s32 %v1316, 144
          %v1335 = vadd.s32 %v1316, 152
          %v1336 = vadd.s32 %v1316, 160
          %v1337 = vadd.s32 %v1316, 168
          %v1338 = vadd.s32 %v1316, 176
          %v1339 = vadd.s32 %v1316, 184
          %v1340 = vadd.s32 %v1316, 192
          %v1341 = vadd.s32 %v1316, 200
          %v1342 = vadd.s32 %v1316, 208
          %v1343 = vadd.s32 %v1316, 216
          %v1344 = vadd.s32 %v1316, 224
          %v1345 = vadd.s32 %v1316, 232
          %v1346 = vadd.s32 %v1316, 240
          %v1347 = vadd.s32 %v1316, 248
          %v1348 = vstv %s1216
          %v1349 = vadd.s32 %v1348, %v1316
          %v1350 = vadd.s32 %v1348, %v1317
          %v1351 = vadd.s32 %v1348, %v1318
          %v1352 = vadd.s32 %v1348, %v1319
          %v1353 = vadd.s32 %v1348, %v1320
          %v1354 = vadd.s32 %v1348, %v1321
          %v1355 = vadd.s32 %v1348, %v1322
          %v1356 = vadd.s32 %v1348, %v1323
          %v1357 = vadd.s32 %v1348, %v1324
          %v1358 = vadd.s32 %v1348, %v1325
          %v1359 = vadd.s32 %v1348, %v1326
          %v1360 = vadd.s32 %v1348, %v1327
          %v1361 = vadd.s32 %v1348, %v1328
          %v1362 = vadd.s32 %v1348, %v1329
          %v1363 = vadd.s32 %v1348, %v1330
          %v1364 = vadd.s32 %v1348, %v1331
          %v1365 = vadd.s32 %v1348, %v1332
          %v1366 = vadd.s32 %v1348, %v1333
          %v1367 = vadd.s32 %v1348, %v1334
          %v1368 = vadd.s32 %v1348, %v1335
          %v1369 = vadd.s32 %v1348, %v1336
          %v1370 = vadd.s32 %v1348, %v1337
          %v1371 = vadd.s32 %v1348, %v1338
          %v1372 = vadd.s32 %v1348, %v1339
          %v1373 = vadd.s32 %v1348, %v1340
          %v1374 = vadd.s32 %v1348, %v1341
          %v1375 = vadd.s32 %v1348, %v1342
          %v1376 = vadd.s32 %v1348, %v1343
          %v1377 = vadd.s32 %v1348, %v1344
          %v1378 = vadd.s32 %v1348, %v1345
          %v1379 = vadd.s32 %v1348, %v1346
          %v1380 = vadd.s32 %v1348, %v1347
          %v1381 = vlaneseq
          %v1382 = vand.u32 %v1381, 127
          %v1383 = vadd.s32 %v1382, 128
          %v1384 = vstv %s1217
          %v1385 = vadd.s32 %v1384, %v1382
          %v1386 = vadd.s32 %v1384, %v1383
          %vm1387 = vcmp.lt.s32.totalorder %v1349, 800
          %vm1388 = vcmp.lt.s32.totalorder %v1350, 800
          %vm1389 = vcmp.lt.s32.totalorder %v1351, 800
          %vm1390 = vcmp.lt.s32.totalorder %v1352, 800
          %vm1391 = vcmp.lt.s32.totalorder %v1353, 800
          %vm1392 = vcmp.lt.s32.totalorder %v1354, 800
          %vm1393 = vcmp.lt.s32.totalorder %v1355, 800
          %vm1394 = vcmp.lt.s32.totalorder %v1356, 800
          %vm1395 = vcmp.lt.s32.totalorder %v1357, 800
          %vm1396 = vcmp.lt.s32.totalorder %v1358, 800
          %vm1397 = vcmp.lt.s32.totalorder %v1359, 800
          %vm1398 = vcmp.lt.s32.totalorder %v1360, 800
          %vm1399 = vcmp.lt.s32.totalorder %v1361, 800
          %vm1400 = vcmp.lt.s32.totalorder %v1362, 800
          %vm1401 = vcmp.lt.s32.totalorder %v1363, 800
          %vm1402 = vcmp.lt.s32.totalorder %v1364, 800
          %vm1403 = vcmp.lt.s32.totalorder %v1365, 800
          %vm1404 = vcmp.lt.s32.totalorder %v1366, 800
          %vm1405 = vcmp.lt.s32.totalorder %v1367, 800
          %vm1406 = vcmp.lt.s32.totalorder %v1368, 800
          %vm1407 = vcmp.lt.s32.totalorder %v1369, 800
          %vm1408 = vcmp.lt.s32.totalorder %v1370, 800
          %vm1409 = vcmp.lt.s32.totalorder %v1371, 800
          %vm1410 = vcmp.lt.s32.totalorder %v1372, 800
          %vm1411 = vcmp.lt.s32.totalorder %v1373, 800
          %vm1412 = vcmp.lt.s32.totalorder %v1374, 800
          %vm1413 = vcmp.lt.s32.totalorder %v1375, 800
          %vm1414 = vcmp.lt.s32.totalorder %v1376, 800
          %vm1415 = vcmp.lt.s32.totalorder %v1377, 800
          %vm1416 = vcmp.lt.s32.totalorder %v1378, 800
          %vm1417 = vcmp.lt.s32.totalorder %v1379, 800
          %vm1418 = vcmp.lt.s32.totalorder %v1380, 800
          %vm1419 = vcmp.lt.s32.totalorder %v1385, 800
          %vm1420 = vcmp.lt.s32.totalorder %v1386, 800
          %v1421 = vsel %vm1387, 1, 0
          %v1422 = vsel %vm1388, 1, 0
          %v1423 = vsel %vm1389, 1, 0
          %v1424 = vsel %vm1390, 1, 0
          %v1425 = vsel %vm1391, 1, 0
          %v1426 = vsel %vm1392, 1, 0
          %v1427 = vsel %vm1393, 1, 0
          %v1428 = vsel %vm1394, 1, 0
          %v1429 = vsel %vm1395, 1, 0
          %v1430 = vsel %vm1396, 1, 0
          %v1431 = vsel %vm1397, 1, 0
          %v1432 = vsel %vm1398, 1, 0
          %v1433 = vsel %vm1399, 1, 0
          %v1434 = vsel %vm1400, 1, 0
          %v1435 = vsel %vm1401, 1, 0
          %v1436 = vsel %vm1402, 1, 0
          %v1437 = vsel %vm1403, 1, 0
          %v1438 = vsel %vm1404, 1, 0
          %v1439 = vsel %vm1405, 1, 0
          %v1440 = vsel %vm1406, 1, 0
          %v1441 = vsel %vm1407, 1, 0
          %v1442 = vsel %vm1408, 1, 0
          %v1443 = vsel %vm1409, 1, 0
          %v1444 = vsel %vm1410, 1, 0
          %v1445 = vsel %vm1411, 1, 0
          %v1446 = vsel %vm1412, 1, 0
          %v1447 = vsel %vm1413, 1, 0
          %v1448 = vsel %vm1414, 1, 0
          %v1449 = vsel %vm1415, 1, 0
          %v1450 = vsel %vm1416, 1, 0
          %v1451 = vsel %vm1417, 1, 0
          %v1452 = vsel %vm1418, 1, 0
          %vm1453 = vcmp.eq.s32.totalorder %v1421, 1
          %vm1454 = vcmp.eq.s32.totalorder %v1422, 1
          %vm1455 = vcmp.eq.s32.totalorder %v1423, 1
          %vm1456 = vcmp.eq.s32.totalorder %v1424, 1
          %vm1457 = vcmp.eq.s32.totalorder %v1425, 1
          %vm1458 = vcmp.eq.s32.totalorder %v1426, 1
          %vm1459 = vcmp.eq.s32.totalorder %v1427, 1
          %vm1460 = vcmp.eq.s32.totalorder %v1428, 1
          %vm1461 = vcmp.eq.s32.totalorder %v1429, 1
          %vm1462 = vcmp.eq.s32.totalorder %v1430, 1
          %vm1463 = vcmp.eq.s32.totalorder %v1431, 1
          %vm1464 = vcmp.eq.s32.totalorder %v1432, 1
          %vm1465 = vcmp.eq.s32.totalorder %v1433, 1
          %vm1466 = vcmp.eq.s32.totalorder %v1434, 1
          %vm1467 = vcmp.eq.s32.totalorder %v1435, 1
          %vm1468 = vcmp.eq.s32.totalorder %v1436, 1
          %vm1469 = vcmp.eq.s32.totalorder %v1437, 1
          %vm1470 = vcmp.eq.s32.totalorder %v1438, 1
          %vm1471 = vcmp.eq.s32.totalorder %v1439, 1
          %vm1472 = vcmp.eq.s32.totalorder %v1440, 1
          %vm1473 = vcmp.eq.s32.totalorder %v1441, 1
          %vm1474 = vcmp.eq.s32.totalorder %v1442, 1
          %vm1475 = vcmp.eq.s32.totalorder %v1443, 1
          %vm1476 = vcmp.eq.s32.totalorder %v1444, 1
          %vm1477 = vcmp.eq.s32.totalorder %v1445, 1
          %vm1478 = vcmp.eq.s32.totalorder %v1446, 1
          %vm1479 = vcmp.eq.s32.totalorder %v1447, 1
          %vm1480 = vcmp.eq.s32.totalorder %v1448, 1
          %vm1481 = vcmp.eq.s32.totalorder %v1449, 1
          %vm1482 = vcmp.eq.s32.totalorder %v1450, 1
          %vm1483 = vcmp.eq.s32.totalorder %v1451, 1
          %vm1484 = vcmp.eq.s32.totalorder %v1452, 1
          %v1485 = vsel %vm1419, 1, 0
          %v1486 = vsel %vm1420, 1, 0
          %vm1487 = vcmp.eq.s32.totalorder %v1485, 1
          %vm1488 = vcmp.eq.s32.totalorder %v1486, 1
          %vm1489 = vmand %vm1453, %vm1487
          %vm1490 = vmand %vm1453, %vm1488
          %vm1491 = vmand %vm1454, %vm1487
          %vm1492 = vmand %vm1454, %vm1488
          %vm1493 = vmand %vm1455, %vm1487
          %vm1494 = vmand %vm1455, %vm1488
          %vm1495 = vmand %vm1456, %vm1487
          %vm1496 = vmand %vm1456, %vm1488
          %vm1497 = vmand %vm1457, %vm1487
          %vm1498 = vmand %vm1457, %vm1488
          %vm1499 = vmand %vm1458, %vm1487
          %vm1500 = vmand %vm1458, %vm1488
          %vm1501 = vmand %vm1459, %vm1487
          %vm1502 = vmand %vm1459, %vm1488
          %vm1503 = vmand %vm1460, %vm1487
          %vm1504 = vmand %vm1460, %vm1488
          %vm1505 = vmand %vm1461, %vm1487
          %vm1506 = vmand %vm1461, %vm1488
          %vm1507 = vmand %vm1462, %vm1487
          %vm1508 = vmand %vm1462, %vm1488
          %vm1509 = vmand %vm1463, %vm1487
          %vm1510 = vmand %vm1463, %vm1488
          %vm1511 = vmand %vm1464, %vm1487
          %vm1512 = vmand %vm1464, %vm1488
          %vm1513 = vmand %vm1465, %vm1487
          %vm1514 = vmand %vm1465, %vm1488
          %vm1515 = vmand %vm1466, %vm1487
          %vm1516 = vmand %vm1466, %vm1488
          %vm1517 = vmand %vm1467, %vm1487
          %vm1518 = vmand %vm1467, %vm1488
          %vm1519 = vmand %vm1468, %vm1487
          %vm1520 = vmand %vm1468, %vm1488
          %vm1521 = vmand %vm1469, %vm1487
          %vm1522 = vmand %vm1469, %vm1488
          %vm1523 = vmand %vm1470, %vm1487
          %vm1524 = vmand %vm1470, %vm1488
          %vm1525 = vmand %vm1471, %vm1487
          %vm1526 = vmand %vm1471, %vm1488
          %vm1527 = vmand %vm1472, %vm1487
          %vm1528 = vmand %vm1472, %vm1488
          %vm1529 = vmand %vm1473, %vm1487
          %vm1530 = vmand %vm1473, %vm1488
          %vm1531 = vmand %vm1474, %vm1487
          %vm1532 = vmand %vm1474, %vm1488
          %vm1533 = vmand %vm1475, %vm1487
          %vm1534 = vmand %vm1475, %vm1488
          %vm1535 = vmand %vm1476, %vm1487
          %vm1536 = vmand %vm1476, %vm1488
          %vm1537 = vmand %vm1477, %vm1487
          %vm1538 = vmand %vm1477, %vm1488
          %vm1539 = vmand %vm1478, %vm1487
          %vm1540 = vmand %vm1478, %vm1488
          %vm1541 = vmand %vm1479, %vm1487
          %vm1542 = vmand %vm1479, %vm1488
          %vm1543 = vmand %vm1480, %vm1487
          %vm1544 = vmand %vm1480, %vm1488
          %vm1545 = vmand %vm1481, %vm1487
          %vm1546 = vmand %vm1481, %vm1488
          %vm1547 = vmand %vm1482, %vm1487
          %vm1548 = vmand %vm1482, %vm1488
          %vm1549 = vmand %vm1483, %vm1487
          %vm1550 = vmand %vm1483, %vm1488
          %vm1551 = vmand %vm1484, %vm1487
          %vm1552 = vmand %vm1484, %vm1488
          %v1553 = vsel %vm1489, %v1152, 0.0
          %v1554 = vsel %vm1490, %v1153, 0.0
          %v1555 = vsel %vm1491, %v1154, 0.0
          %v1556 = vsel %vm1492, %v1155, 0.0
          %v1557 = vsel %vm1493, %v1156, 0.0
          %v1558 = vsel %vm1494, %v1157, 0.0
          %v1559 = vsel %vm1495, %v1158, 0.0
          %v1560 = vsel %vm1496, %v1159, 0.0
          %v1561 = vsel %vm1497, %v1160, 0.0
          %v1562 = vsel %vm1498, %v1161, 0.0
          %v1563 = vsel %vm1499, %v1162, 0.0
          %v1564 = vsel %vm1500, %v1163, 0.0
          %v1565 = vsel %vm1501, %v1164, 0.0
          %v1566 = vsel %vm1502, %v1165, 0.0
          %v1567 = vsel %vm1503, %v1166, 0.0
          %v1568 = vsel %vm1504, %v1167, 0.0
          %v1569 = vsel %vm1505, %v1168, 0.0
          %v1570 = vsel %vm1506, %v1169, 0.0
          %v1571 = vsel %vm1507, %v1170, 0.0
          %v1572 = vsel %vm1508, %v1171, 0.0
          %v1573 = vsel %vm1509, %v1172, 0.0
          %v1574 = vsel %vm1510, %v1173, 0.0
          %v1575 = vsel %vm1511, %v1174, 0.0
          %v1576 = vsel %vm1512, %v1175, 0.0
          %v1577 = vsel %vm1513, %v1176, 0.0
          %v1578 = vsel %vm1514, %v1177, 0.0
          %v1579 = vsel %vm1515, %v1178, 0.0
          %v1580 = vsel %vm1516, %v1179, 0.0
          %v1581 = vsel %vm1517, %v1180, 0.0
          %v1582 = vsel %vm1518, %v1181, 0.0
          %v1583 = vsel %vm1519, %v1182, 0.0
          %v1584 = vsel %vm1520, %v1183, 0.0
          %v1585 = vsel %vm1521, %v1184, 0.0
          %v1586 = vsel %vm1522, %v1185, 0.0
          %v1587 = vsel %vm1523, %v1186, 0.0
          %v1588 = vsel %vm1524, %v1187, 0.0
          %v1589 = vsel %vm1525, %v1188, 0.0
          %v1590 = vsel %vm1526, %v1189, 0.0
          %v1591 = vsel %vm1527, %v1190, 0.0
          %v1592 = vsel %vm1528, %v1191, 0.0
          %v1593 = vsel %vm1529, %v1192, 0.0
          %v1594 = vsel %vm1530, %v1193, 0.0
          %v1595 = vsel %vm1531, %v1194, 0.0
          %v1596 = vsel %vm1532, %v1195, 0.0
          %v1597 = vsel %vm1533, %v1196, 0.0
          %v1598 = vsel %vm1534, %v1197, 0.0
          %v1599 = vsel %vm1535, %v1198, 0.0
          %v1600 = vsel %vm1536, %v1199, 0.0
          %v1601 = vsel %vm1537, %v1200, 0.0
          %v1602 = vsel %vm1538, %v1201, 0.0
          %v1603 = vsel %vm1539, %v1202, 0.0
          %v1604 = vsel %vm1540, %v1203, 0.0
          %v1605 = vsel %vm1541, %v1204, 0.0
          %v1606 = vsel %vm1542, %v1205, 0.0
          %v1607 = vsel %vm1543, %v1206, 0.0
          %v1608 = vsel %vm1544, %v1207, 0.0
          %v1609 = vsel %vm1545, %v1208, 0.0
          %v1610 = vsel %vm1546, %v1209, 0.0
          %v1611 = vsel %vm1547, %v1210, 0.0
          %v1612 = vsel %vm1548, %v1211, 0.0
          %v1613 = vsel %vm1549, %v1212, 0.0
          %v1614 = vsel %vm1550, %v1213, 0.0
          %v1615 = vsel %vm1551, %v1214, 0.0
          %v1616 = vsel %vm1552, %v1215, 0.0
          %v1617 = vld [vmem:[%s247] sm:$0xff]
          %v1618 = vld [vmem:[%s247 + $0x8] sm:$0xff]
          %1619 = vmatpush.msra.mxu0 %v1583
          %1620 = vmatpush.msra.mxu0 %v1581
          %1621 = vmatpush.msra.mxu0 %v1579
          %1622 = vmatpush.msra.mxu0 %v1577
          %1623 = vmatpush.msra.mxu0 %v1575
          %1624 = vmatpush.msra.mxu0 %v1573
          %1625 = vmatpush.msra.mxu0 %v1571
          %1626 = vmatpush.msra.mxu0 %v1569
          %1627 = vmatpush.msra.mxu0 %v1567
          %1628 = vmatpush.msra.mxu0 %v1565
          %1629 = vmatpush.msra.mxu0 %v1563
          %1630 = vmatpush.msra.mxu0 %v1561
          %1631 = vmatpush.msra.mxu0 %v1559
          %1632 = vmatpush.msra.mxu0 %v1557
          %1633 = vmatpush.msra.mxu0 %v1555
          %1634 = vmatpush.msra.mxu0 %v1553
          %1635 = vmatmul.f32.gmra.mxu0 1.0
          %v1636 = vpop.f32.mrf.mxu0
          %v1637 = vadd.f32 0.0, %v1636
          %1638 = vdwg.mxu0
          %1639 = vmatpush.msra.mxu0 %v1615
          %1640 = vmatpush.msra.mxu0 %v1613
          %1641 = vmatpush.msra.mxu0 %v1611
          %1642 = vmatpush.msra.mxu0 %v1609
          %1643 = vmatpush.msra.mxu0 %v1607
          %1644 = vmatpush.msra.mxu0 %v1605
          %1645 = vmatpush.msra.mxu0 %v1603
          %1646 = vmatpush.msra.mxu0 %v1601
          %1647 = vmatpush.msra.mxu0 %v1599
          %1648 = vmatpush.msra.mxu0 %v1597
          %1649 = vmatpush.msra.mxu0 %v1595
          %1650 = vmatpush.msra.mxu0 %v1593
          %1651 = vmatpush.msra.mxu0 %v1591
          %1652 = vmatpush.msra.mxu0 %v1589
          %1653 = vmatpush.msra.mxu0 %v1587
          %1654 = vmatpush.msra.mxu0 %v1585
          %1655 = vmatmul.f32.gmra.mxu0 1.0
          %v1656 = vpop.f32.mrf.mxu0
          %v1657 = vadd.f32 %v1637, %v1656
          %1658 = vdwg.mxu0
          %1659 = vmatpush.msra.mxu0 %v1584
          %1660 = vmatpush.msra.mxu0 %v1582
          %1661 = vmatpush.msra.mxu0 %v1580
          %1662 = vmatpush.msra.mxu0 %v1578
          %1663 = vmatpush.msra.mxu0 %v1576
          %1664 = vmatpush.msra.mxu0 %v1574
          %1665 = vmatpush.msra.mxu0 %v1572
          %1666 = vmatpush.msra.mxu0 %v1570
          %1667 = vmatpush.msra.mxu0 %v1568
          %1668 = vmatpush.msra.mxu0 %v1566
          %1669 = vmatpush.msra.mxu0 %v1564
          %1670 = vmatpush.msra.mxu0 %v1562
          %1671 = vmatpush.msra.mxu0 %v1560
          %1672 = vmatpush.msra.mxu0 %v1558
          %1673 = vmatpush.msra.mxu0 %v1556
          %1674 = vmatpush.msra.mxu0 %v1554
          %1675 = vmatmul.f32.gmra.mxu0 1.0
          %v1676 = vpop.f32.mrf.mxu0
          %v1677 = vadd.f32 0.0, %v1676
          %1678 = vdwg.mxu0
          %1679 = vmatpush.msra.mxu0 %v1616
          %1680 = vmatpush.msra.mxu0 %v1614
          %1681 = vmatpush.msra.mxu0 %v1612
          %1682 = vmatpush.msra.mxu0 %v1610
          %1683 = vmatpush.msra.mxu0 %v1608
          %1684 = vmatpush.msra.mxu0 %v1606
          %1685 = vmatpush.msra.mxu0 %v1604
          %1686 = vmatpush.msra.mxu0 %v1602
          %1687 = vmatpush.msra.mxu0 %v1600
          %1688 = vmatpush.msra.mxu0 %v1598
          %1689 = vmatpush.msra.mxu0 %v1596
          %1690 = vmatpush.msra.mxu0 %v1594
          %1691 = vmatpush.msra.mxu0 %v1592
          %1692 = vmatpush.msra.mxu0 %v1590
          %1693 = vmatpush.msra.mxu0 %v1588
          %1694 = vmatpush.msra.mxu0 %v1586
          %1695 = vmatmul.f32.gmra.mxu0 1.0
          %v1696 = vpop.f32.mrf.mxu0
          %v1697 = vadd.f32 %v1677, %v1696
          %1698 = vdwg.mxu0
          %v1699 = vadd.f32 %v1617, %v1657
          %v1700 = vadd.f32 %v1618, %v1697
          %1701 = vst [vmem:[%s247] sm:$0xff] %v1699
          %1702 = vst [vmem:[%s247 + $0x8] sm:$0xff] %v1700
        $region48: #{tpu_custom_call.1} parent=35 // pred_fallthru
          _
        %s1703 = sand.u32 %s142, 1
        %s1704 = scalar_lea.sflag [#allocation3], %s1703
        %s1705 = sand.u32 %s142, 1
        %s1706 = smul.addr %s1705, 16
        %s1707 = scalar_lea.vmem [#allocation2], %s1706
        // Predicated region
        $region49: #{tpu_custom_call.1} parent=35 // pred_check
          %p1708 = pneg %p152
        $region50: #{tpu_custom_call.1} parent=35 // pred_check_branch
          %1710 = sbr.rel (%p1708) target = $region52
        $region51: #{tpu_custom_call.1} parent=35 // pred_region
          %1712 = vsyncadd %s1704, 0
          %s1713 = smul.addr %s22, 2
          %s1714 = smul.addr %s1713, 8
          %s1715 = scalar_lea.hbm %s4, %s1714
          %s1717 = sshll.u32 %s1707, 4
          %s1718 = int_to_ptr.vmem [resolvable:$true] %s1717
          %s1719 = sshll.u32 %s1715, 4
          %s1720 = int_to_ptr.hbm [resolvable:$true] %s1719
          %1722 = dma.vmem_to_hbm [thread:$0]  %s1718, 256, %s1720, %s1704
        $region52: #{tpu_custom_call.1} parent=35 // pred_fallthru
          _
      $region36: #{tpu_custom_call.1} parent=5 // pred_fallthru
        _
      %p1723 = scmp.le.s32.totalorder 2, %s13
      // Predicated region
      $region53: #{tpu_custom_call.1} parent=5 // pred_check
        %p1724 = pneg %p1723
      $region54: #{tpu_custom_call.1} parent=5 // pred_check_branch
        %1726 = sbr.rel (%p1724) target = $region56
      $region55: #{tpu_custom_call.1} parent=5 // pred_region
        %s1727 = ssub.s32 %s13, 2
        // Predicated region
        $region57: #{tpu_custom_call.1} parent=55 // pred_check
          %p1728 = pneg %p158
        $region58: #{tpu_custom_call.1} parent=55 // pred_check_branch
          %1730 = sbr.rel (%p1728) target = $region60
        $region59: #{tpu_custom_call.1} parent=55 // pred_region
          %s1731 = sand.u32 %s143, 1
          %s1732 = scalar_lea.sflag [#allocation3], %s1731
          %s1733 = sand.u32 %s143, 1
          %s1734 = smul.addr %s1733, 16
          %s1735 = scalar_lea.vmem [#allocation2], %s1734
          %1737 = dma.done %s1732, 256
        $region60: #{tpu_custom_call.1} parent=55 // pred_fallthru
          _
      $region56: #{tpu_custom_call.1} parent=5 // pred_fallthru
        _
    $region6: #{tpu_custom_call.1} parent=1 // loop_footer
      %s17 = sadd.s32 1, %s13
    $region7: #{tpu_custom_call.1} parent=1 // loop_footer_branch
      %12 = sbr.rel target = $region3
    $region8: #{tpu_custom_call.1} parent=1 // loop_exit
      _
    %1738 = vsyncpa [#allocation3], 1
    %s1739 = scalar_lea.sflag [#allocation3], 1
    %1740 = vsyncpa %s1739, 1

</llo_original>
